<compile_context>
chip_gen: v6e
topology: v6e:2x2x1
jax: 0.10.0
libtpu: 0.0.40
codegen_flags: <defaults>
</compile_context>

<pallas_src>
import functools

import numpy as np
import jax
import jax.numpy as jnp
from jax.experimental import pallas as pl
from jax.experimental.pallas import tpu as pltpu


CONV1D_K = 9            # att_conv1d_2 kernel size (padding = 4, 'same')
BN_EPS = 1e-5
HP = jax.lax.Precision.HIGHEST


# --------------------------------- Pallas kernel ---------------------------------
def _ftb_kernel(FA, K,
                x_ref, w1_ref, b1_ref, w2e_ref, b2e_ref, m_ref,
                wa_ref, wf_ref, bo_ref, o_ref):
    """One batch element: [T, F*C] channel-last slab, everything lane-dense (F*C=128)."""
    cdt = w1_ref.dtype                                               # MXU operand dtype
    x = x_ref[...]                                                   # [T, FC] (cdt)
    xf = x.astype(jnp.float32)

    # --- attention 1x1 conv (+ folded BN + ReLU), block-diagonal over f ----------
    a1 = jnp.dot(x, w1_ref[...], preferred_element_type=jnp.float32) + b1_ref[...]
    a1 = jnp.maximum(a1, 0.0).astype(cdt)                            # [T, FA]

    # --- Conv1d over time (kernel K, 'same') with the channel broadcast folded into
    #     the tap weights.  Per-tap lane-dense dots (aligned 8-row weight slices),
    #     row-stack, then one 0/1 shift-combine matmul realizes the K time shifts on
    #     the MXU -- no padded scratch, no misaligned sublane traffic. ---------------
    taps = [jnp.dot(a1, w2e_ref[d * FA:(d + 1) * FA, :],
                    preferred_element_type=jnp.float32) for d in range(K)]
    y_stack = jnp.concatenate(taps, axis=0)                          # [K*T, FC] f32
    att = jnp.dot(m_ref[...], y_stack, preferred_element_type=jnp.float32)
    att = jnp.maximum(att + b2e_ref[...], 0.0)                       # [T, FC] (rep. over c)

    # --- gate x by the attention; frequencyFC fused into the ffc-half of the output
    #     1x1 conv; plus the x-half, folded BN bias, ReLU ---------------------------
    atted = (xf * att).astype(cdt)
    y = (jnp.dot(x, wa_ref[...], preferred_element_type=jnp.float32)
         + jnp.dot(atted, wf_ref[...], preferred_element_type=jnp.float32)
         + bo_ref[...])
    o_ref[...] = jnp.maximum(y, 0.0).astype(o_ref.dtype)             # [T, FC] 128-lane vst


# ------------------------------ weight packing (once) ------------------------------
def _bn_fold(bn, eps=BN_EPS):
    scale = bn['gamma'] / jnp.sqrt(bn['rv'] + eps)
    shift = bn['beta'] - bn['rm'] * scale
    return scale, shift


def pack_ftb_params(p, compute_dtype=jnp.float32):
    """Fold eval-mode BN + pack lane-dense (kron / tap-expanded / fused) weights.

    Call ONCE per parameter set (outside the per-step forward path)."""
    f32 = jnp.float32
    A, C = p['att_c1']['w'].shape[:2]
    F = p['ffc']['w'].shape[0]
    K = p['att_c2']['w'].shape[-1]
    eyeF = jnp.eye(F, dtype=f32)

    # attention 1x1 conv + BN
    s1, t1 = _bn_fold(p['att_c1_bn'])
    w1 = p['att_c1']['w'][:, :, 0, 0] * s1[:, None]                  # [A, C]
    b1 = p['att_c1']['b'] * s1 + t1
    w1_big = jnp.kron(eyeF, w1.T)                                    # [F*C, F*A]
    b1_big = jnp.tile(b1, F)[None, :]

    # 9-tap Conv1d over time + BN; channel broadcast (col replication over C) folded in
    s2, t2 = _bn_fold(p['att_c2_bn'])
    w2 = p['att_c2']['w'] * s2[:, None, None]                        # [F, A*F, K]
    b2 = p['att_c2']['b'] * s2 + t2
    # torch Conv1d input-channel index is a*F+f ; kernel rows are ordered f*A+a,
    # with the K taps stacked along rows.
    w2_big = w2.reshape(F, A, F, K).transpose(3, 2, 1, 0).reshape(K * F * A, F)
    w2e_big = jnp.repeat(w2_big, C, axis=1)                          # [K*F*A, F*C] (exact)
    b2e_big = jnp.repeat(b2, C)[None, :]                             # [1, F*C]

    # frequencyFC (kron keeps the (f, c) lane layout)
    wffc_big = jnp.kron(p['ffc']['w'].T, jnp.eye(C, dtype=f32))      # [F*C, F*C]
    bffc_big = jnp.repeat(p['ffc']['b'], C)[None, :]

    # output 1x1 conv + BN; split into x-half and ffc-half, fold frequencyFC into the
    # ffc-half so the kernel needs only two output matmuls.
    so, to = _bn_fold(p['out_c_bn'])
    wo = p['out_c']['w'][:, :, 0, 0] * so[:, None]                   # [C, 2C]
    bo = p['out_c']['b'] * so + to
    wa_big = jnp.kron(eyeF, wo[:, :C].T)                             # x part   [F*C, F*C]
    wb_big = jnp.kron(eyeF, wo[:, C:].T)                             # ffc part [F*C, F*C]
    wf_big = jnp.dot(wffc_big, wb_big, precision=HP)                 # fused ffc->out
    bo_big = (jnp.tile(bo, F)[None, :]
              + jnp.dot(bffc_big, wb_big, precision=HP))             # [1, F*C]

    cdt = compute_dtype
    return {
        'w1': w1_big.astype(cdt), 'b1': b1_big.astype(f32),
        'w2e': w2e_big.astype(cdt), 'b2e': b2e_big.astype(f32),
        'wa': wa_big.astype(cdt), 'wf': wf_big.astype(cdt), 'bo': bo_big.astype(f32),
    }


# ------------------------------------ wrapper -------------------------------------
def ftb_forward(x, packed):
    """FrequencyTransformationBlock forward.  x: [N, C, F, T] (torch NCHW)."""
    N, C, F, T = x.shape
    FC = F * C
    FA = packed['w1'].shape[1]
    K = packed['w2e'].shape[0] // FA
    assert packed['w1'].shape[0] == FC and FC <= 128, \
        "Kron-dense layout assumes F*C <= 128"  # TODO(synk): block-structured for larger F

    cdt = packed['w1'].dtype
    # channel-last, (f, c)-flattened activations; NCHW only at the module boundary
    x_fc = x.transpose(0, 3, 2, 1).reshape(N * T, FC).astype(cdt)

    # 0/1 shift-combine matrix for the 'same' time conv (trace-time numpy constant)
    P = K // 2
    m = np.zeros((T, K * T), np.float32)
    for d in range(K):
        for t in range(T):
            s = t + d - P
            if 0 <= s < T:
                m[t, d * T + s] = 1.0
    shift_mat = jnp.asarray(m)

    kernel = functools.partial(_ftb_kernel, FA, K)
    wspec = lambda shape: pl.BlockSpec(shape, lambda n: (0, 0))      # resident weights

    out_fc = pl.pallas_call(
        kernel,
        grid=(N,),
        out_shape=jax.ShapeDtypeStruct((N * T, FC), jnp.float32),
        in_specs=[
            pl.BlockSpec((T, FC), lambda n: (n, 0)),                 # x  (per-batch tile)
            wspec((FC, FA)), wspec((1, FA)),                         # w1, b1
            wspec((K * FA, FC)), wspec((1, FC)),                     # w2e, b2e
            wspec((T, K * T)),                                       # shift-combine
            wspec((FC, FC)), wspec((FC, FC)), wspec((1, FC)),        # wa, wf(fused), bo
        ],
        out_specs=pl.BlockSpec((T, FC), lambda n: (n, 0)),
        compiler_params=pltpu.CompilerParams(
            dimension_semantics=("parallel",)),                      # 2 TCs on v7x
    )(x_fc, packed['w1'], packed['b1'], packed['w2e'], packed['b2e'],
      shift_mat, packed['wa'], packed['wf'], packed['bo'])

    return out_fc.reshape(N, T, F, C).transpose(0, 3, 2, 1)


# ----------------------------- pure-JAX reference ---------------------------------
def ftb_reference(x, p):
    """Eval-mode reference mirroring the torch module (for correctness checking)."""
    N, C, F, T = x.shape
    K = p['att_c2']['w'].shape[-1]
    pad = K // 2

    s1, t1 = _bn_fold(p['att_c1_bn'])
    a1 = jnp.einsum('ac,ncft->naft', p['att_c1']['w'][:, :, 0, 0], x, precision=HP)
    a1 = a1 + p['att_c1']['b'][None, :, None, None]
    a1 = jax.nn.relu(a1 * s1[None, :, None, None] + t1[None, :, None, None])

    A = a1.shape[1]
    a1p = jnp.pad(a1.reshape(N, A * F, T), ((0, 0), (0, 0), (pad, pad)))
    att = jnp.zeros((N, F, T), jnp.float32)
    for k in range(K):
        att = att + jnp.einsum('gc,nct->ngt', p['att_c2']['w'][:, :, k],
                               a1p[:, :, k:k + T], precision=HP)
    att = att + p['att_c2']['b'][None, :, None]
    s2, t2 = _bn_fold(p['att_c2_bn'])
    att = jax.nn.relu(att * s2[None, :, None] + t2[None, :, None])

    atted = x * att[:, None, :, :]
    ffc_T = jnp.einsum('nctf,gf->nctg', atted.transpose(0, 1, 3, 2),
                       p['ffc']['w'], precision=HP) + p['ffc']['b']
    ffc = ffc_T.transpose(0, 1, 3, 2)

    cat = jnp.concatenate([x, ffc], axis=1)
    so, to = _bn_fold(p['out_c_bn'])
    out = jnp.einsum('oc,ncft->noft', p['out_c']['w'][:, :, 0, 0], cat, precision=HP)
    out = out + p['out_c']['b'][None, :, None, None]
    return jax.nn.relu(out * so[None, :, None, None] + to[None, :, None, None])


# --------------------------------- param init -------------------------------------
def init_params(key, C, F, A=5, K=CONV1D_K):
    ks = jax.random.split(key, 11)

    def w(k, shape, fan_in):
        return jax.random.normal(k, shape, jnp.float32) * (0.5 / (fan_in ** 0.5))

    def bn(k, c):
        k1, k2, k3, k4 = jax.random.split(k, 4)
        return {'gamma': 1.0 + 0.1 * jax.random.normal(k1, (c,), jnp.float32),
                'beta': 0.1 * jax.random.normal(k2, (c,), jnp.float32),
                'rm': 0.1 * jax.random.normal(k3, (c,), jnp.float32),
                'rv': 0.9 + 0.2 * jnp.abs(jax.random.normal(k4, (c,), jnp.float32))}

    return {
        'att_c1': {'w': w(ks[0], (A, C, 1, 1), C), 'b': w(ks[1], (A,), C)},
        'att_c1_bn': bn(ks[2], A),
        'att_c2': {'w': w(ks[3], (F, A * F, K), A * F * K),
                   'b': w(ks[4], (F,), A * F * K)},
        'att_c2_bn': bn(ks[5], F),
        'ffc': {'w': w(ks[6], (F, F), F), 'b': w(ks[7], (F,), F)},
        'out_c': {'w': w(ks[8], (C, 2 * C, 1, 1), 2 * C), 'b': w(ks[9], (C,), 2 * C)},
        'out_c_bn': bn(ks[10], C),
    }


# ------------------------------------- main ----------------------------------------
if __name__ == "__main__":
    # channel_in_out = 8 (channel_A), frequency_dim = 16, channel_attention = 5
    N, C, F, T = 2, 8, 16, 16
    key = jax.random.PRNGKey(0)
    kp, kx = jax.random.split(key)
    params = init_params(kp, C=C, F=F, A=5, K=CONV1D_K)
    x = jax.random.normal(kx, (N, C, F, T), jnp.float32)

    ref = ftb_reference(x, params)
    ref_max = float(jnp.max(jnp.abs(ref)))

    fwd = jax.jit(ftb_forward)

    # f32 MXU operands: faithful to the (eval-mode) module numerics.
    packed_f32 = pack_ftb_params(params, jnp.float32)
    out32 = jax.block_until_ready(fwd(x, packed_f32))
    assert out32.shape == (N, C, F, T)
    err32 = float(jnp.max(jnp.abs(out32 - ref)))
    assert err32 < 1e-3 + 1e-3 * ref_max, f"f32 Pallas/reference mismatch: {err32}"

    # bf16 MXU operands (fast path on v5e/v6e), f32 accumulation; bf16-level tolerance.
    packed_bf16 = pack_ftb_params(params, jnp.bfloat16)
    out16 = jax.block_until_ready(fwd(x, packed_bf16))
    assert out16.shape == (N, C, F, T)
    err16 = float(jnp.max(jnp.abs(out16 - ref)))
    assert err16 < 3e-2 + 2e-2 * ref_max, f"bf16 Pallas/reference mismatch: {err16}"

    print("KERNEL_OK")
</pallas_src>

<mosaic_0001>
module attributes {stable_mosaic.version = 11 : i64} {
  func.func @_ftb_kernel(%arg0: i32, %arg1: memref<16x128xf32, #tpu.memory_space<vmem>>, %arg2: memref<128x80xf32, #tpu.memory_space<vmem>>, %arg3: memref<1x80xf32, #tpu.memory_space<vmem>>, %arg4: memref<720x128xf32, #tpu.memory_space<vmem>>, %arg5: memref<1x128xf32, #tpu.memory_space<vmem>>, %arg6: memref<16x144xf32, #tpu.memory_space<vmem>>, %arg7: memref<128x128xf32, #tpu.memory_space<vmem>>, %arg8: memref<128x128xf32, #tpu.memory_space<vmem>>, %arg9: memref<1x128xf32, #tpu.memory_space<vmem>>, %arg10: memref<16x128xf32, #tpu.memory_space<vmem>>) attributes {dimension_semantics = [#tpu.dimension_semantics<parallel>], iteration_bounds = array<i64: 2>, scalar_prefetch = 0 : i64, scratch_operands = 0 : i64, tpu.core_type = #tpu.core_type<tc>, window_params = [{transform_indices = @transform_0, window_bounds = array<i64: 16, 128>}, {pipeline_mode = #tpu.pipeline_mode<synchronous>, transform_indices = @transform_1, window_bounds = array<i64: 128, 80>}, {pipeline_mode = #tpu.pipeline_mode<synchronous>, transform_indices = @transform_2, window_bounds = array<i64: 1, 80>}, {pipeline_mode = #tpu.pipeline_mode<synchronous>, transform_indices = @transform_3, window_bounds = array<i64: 720, 128>}, {pipeline_mode = #tpu.pipeline_mode<synchronous>, transform_indices = @transform_4, window_bounds = array<i64: 1, 128>}, {pipeline_mode = #tpu.pipeline_mode<synchronous>, transform_indices = @transform_5, window_bounds = array<i64: 16, 144>}, {pipeline_mode = #tpu.pipeline_mode<synchronous>, transform_indices = @transform_6, window_bounds = array<i64: 128, 128>}, {pipeline_mode = #tpu.pipeline_mode<synchronous>, transform_indices = @transform_7, window_bounds = array<i64: 128, 128>}, {pipeline_mode = #tpu.pipeline_mode<synchronous>, transform_indices = @transform_8, window_bounds = array<i64: 1, 128>}, {transform_indices = @transform_9, window_bounds = array<i64: 16, 128>}]} {
    %c0 = arith.constant 0 : index
    %c0_0 = arith.constant 0 : index
    %0 = vector.load %arg1[%c0, %c0_0] : memref<16x128xf32, #tpu.memory_space<vmem>>, vector<16x128xf32>
    %c0_1 = arith.constant 0 : index
    %c0_2 = arith.constant 0 : index
    %1 = vector.load %arg2[%c0_1, %c0_2] : memref<128x80xf32, #tpu.memory_space<vmem>>, vector<128x80xf32>
    %cst = arith.constant dense<0.000000e+00> : vector<16x80xf32>
    %2 = tpu.matmul %0, %1, %cst {dimension_numbers = #tpu.dot_dimension_numbers<[1], [0], [0], [1], [0, 0, 1, 1], [], []>} : vector<16x128xf32>, vector<128x80xf32>, vector<16x80xf32> -> vector<16x80xf32>
    %c0_3 = arith.constant 0 : index
    %c0_4 = arith.constant 0 : index
    %3 = vector.load %arg3[%c0_3, %c0_4] : memref<1x80xf32, #tpu.memory_space<vmem>>, vector<1x80xf32>
    %4 = vector.broadcast %3 : vector<1x80xf32> to vector<16x80xf32>
    %5 = arith.addf %2, %4 : vector<16x80xf32>
    %cst_5 = arith.constant 0.000000e+00 : f32
    %6 = vector.broadcast %cst_5 : f32 to vector<16x80xf32>
    %7 = arith.maximumf %5, %6 : vector<16x80xf32>
    %c0_6 = arith.constant 0 : index
    %c0_7 = arith.constant 0 : index
    %8 = vector.load %arg4[%c0_6, %c0_7] : memref<720x128xf32, #tpu.memory_space<vmem>>, vector<80x128xf32>
    %cst_8 = arith.constant dense<0.000000e+00> : vector<16x128xf32>
    %9 = tpu.matmul %7, %8, %cst_8 {dimension_numbers = #tpu.dot_dimension_numbers<[1], [0], [0], [1], [0, 0, 1, 1], [], []>} : vector<16x80xf32>, vector<80x128xf32>, vector<16x128xf32> -> vector<16x128xf32>
    %c80 = arith.constant 80 : index
    %c0_9 = arith.constant 0 : index
    %10 = vector.load %arg4[%c80, %c0_9] : memref<720x128xf32, #tpu.memory_space<vmem>>, vector<80x128xf32>
    %cst_10 = arith.constant dense<0.000000e+00> : vector<16x128xf32>
    %11 = tpu.matmul %7, %10, %cst_10 {dimension_numbers = #tpu.dot_dimension_numbers<[1], [0], [0], [1], [0, 0, 1, 1], [], []>} : vector<16x80xf32>, vector<80x128xf32>, vector<16x128xf32> -> vector<16x128xf32>
    %c160 = arith.constant 160 : index
    %c0_11 = arith.constant 0 : index
    %12 = vector.load %arg4[%c160, %c0_11] : memref<720x128xf32, #tpu.memory_space<vmem>>, vector<80x128xf32>
    %cst_12 = arith.constant dense<0.000000e+00> : vector<16x128xf32>
    %13 = tpu.matmul %7, %12, %cst_12 {dimension_numbers = #tpu.dot_dimension_numbers<[1], [0], [0], [1], [0, 0, 1, 1], [], []>} : vector<16x80xf32>, vector<80x128xf32>, vector<16x128xf32> -> vector<16x128xf32>
    %c240 = arith.constant 240 : index
    %c0_13 = arith.constant 0 : index
    %14 = vector.load %arg4[%c240, %c0_13] : memref<720x128xf32, #tpu.memory_space<vmem>>, vector<80x128xf32>
    %cst_14 = arith.constant dense<0.000000e+00> : vector<16x128xf32>
    %15 = tpu.matmul %7, %14, %cst_14 {dimension_numbers = #tpu.dot_dimension_numbers<[1], [0], [0], [1], [0, 0, 1, 1], [], []>} : vector<16x80xf32>, vector<80x128xf32>, vector<16x128xf32> -> vector<16x128xf32>
    %c320 = arith.constant 320 : index
    %c0_15 = arith.constant 0 : index
    %16 = vector.load %arg4[%c320, %c0_15] : memref<720x128xf32, #tpu.memory_space<vmem>>, vector<80x128xf32>
    %cst_16 = arith.constant dense<0.000000e+00> : vector<16x128xf32>
    %17 = tpu.matmul %7, %16, %cst_16 {dimension_numbers = #tpu.dot_dimension_numbers<[1], [0], [0], [1], [0, 0, 1, 1], [], []>} : vector<16x80xf32>, vector<80x128xf32>, vector<16x128xf32> -> vector<16x128xf32>
    %c400 = arith.constant 400 : index
    %c0_17 = arith.constant 0 : index
    %18 = vector.load %arg4[%c400, %c0_17] : memref<720x128xf32, #tpu.memory_space<vmem>>, vector<80x128xf32>
    %cst_18 = arith.constant dense<0.000000e+00> : vector<16x128xf32>
    %19 = tpu.matmul %7, %18, %cst_18 {dimension_numbers = #tpu.dot_dimension_numbers<[1], [0], [0], [1], [0, 0, 1, 1], [], []>} : vector<16x80xf32>, vector<80x128xf32>, vector<16x128xf32> -> vector<16x128xf32>
    %c480 = arith.constant 480 : index
    %c0_19 = arith.constant 0 : index
    %20 = vector.load %arg4[%c480, %c0_19] : memref<720x128xf32, #tpu.memory_space<vmem>>, vector<80x128xf32>
    %cst_20 = arith.constant dense<0.000000e+00> : vector<16x128xf32>
    %21 = tpu.matmul %7, %20, %cst_20 {dimension_numbers = #tpu.dot_dimension_numbers<[1], [0], [0], [1], [0, 0, 1, 1], [], []>} : vector<16x80xf32>, vector<80x128xf32>, vector<16x128xf32> -> vector<16x128xf32>
    %c560 = arith.constant 560 : index
    %c0_21 = arith.constant 0 : index
    %22 = vector.load %arg4[%c560, %c0_21] : memref<720x128xf32, #tpu.memory_space<vmem>>, vector<80x128xf32>
    %cst_22 = arith.constant dense<0.000000e+00> : vector<16x128xf32>
    %23 = tpu.matmul %7, %22, %cst_22 {dimension_numbers = #tpu.dot_dimension_numbers<[1], [0], [0], [1], [0, 0, 1, 1], [], []>} : vector<16x80xf32>, vector<80x128xf32>, vector<16x128xf32> -> vector<16x128xf32>
    %c640 = arith.constant 640 : index
    %c0_23 = arith.constant 0 : index
    %24 = vector.load %arg4[%c640, %c0_23] : memref<720x128xf32, #tpu.memory_space<vmem>>, vector<80x128xf32>
    %cst_24 = arith.constant dense<0.000000e+00> : vector<16x128xf32>
    %25 = tpu.matmul %7, %24, %cst_24 {dimension_numbers = #tpu.dot_dimension_numbers<[1], [0], [0], [1], [0, 0, 1, 1], [], []>} : vector<16x80xf32>, vector<80x128xf32>, vector<16x128xf32> -> vector<16x128xf32>
    %26 = tpu.concatenate %9, %11, %13, %15, %17, %19, %21, %23, %25 in 0 : vector<16x128xf32>, vector<16x128xf32>, vector<16x128xf32>, vector<16x128xf32>, vector<16x128xf32>, vector<16x128xf32>, vector<16x128xf32>, vector<16x128xf32>, vector<16x128xf32> -> vector<144x128xf32>
    %c0_25 = arith.constant 0 : index
    %c0_26 = arith.constant 0 : index
    %27 = vector.load %arg6[%c0_25, %c0_26] : memref<16x144xf32, #tpu.memory_space<vmem>>, vector<16x144xf32>
    %cst_27 = arith.constant dense<0.000000e+00> : vector<16x128xf32>
    %28 = tpu.matmul %27, %26, %cst_27 {dimension_numbers = #tpu.dot_dimension_numbers<[1], [0], [0], [1], [0, 0, 1, 1], [], []>} : vector<16x144xf32>, vector<144x128xf32>, vector<16x128xf32> -> vector<16x128xf32>
    %c0_28 = arith.constant 0 : index
    %c0_29 = arith.constant 0 : index
    %29 = vector.load %arg5[%c0_28, %c0_29] : memref<1x128xf32, #tpu.memory_space<vmem>>, vector<1x128xf32>
    %30 = vector.broadcast %29 : vector<1x128xf32> to vector<16x128xf32>
    %31 = arith.addf %28, %30 : vector<16x128xf32>
    %cst_30 = arith.constant 0.000000e+00 : f32
    %32 = vector.broadcast %cst_30 : f32 to vector<16x128xf32>
    %33 = arith.maximumf %31, %32 : vector<16x128xf32>
    %34 = arith.mulf %0, %33 : vector<16x128xf32>
    %c0_31 = arith.constant 0 : index
    %c0_32 = arith.constant 0 : index
    %35 = vector.load %arg7[%c0_31, %c0_32] : memref<128x128xf32, #tpu.memory_space<vmem>>, vector<128x128xf32>
    %cst_33 = arith.constant dense<0.000000e+00> : vector<16x128xf32>
    %36 = tpu.matmul %0, %35, %cst_33 {dimension_numbers = #tpu.dot_dimension_numbers<[1], [0], [0], [1], [0, 0, 1, 1], [], []>} : vector<16x128xf32>, vector<128x128xf32>, vector<16x128xf32> -> vector<16x128xf32>
    %c0_34 = arith.constant 0 : index
    %c0_35 = arith.constant 0 : index
    %37 = vector.load %arg8[%c0_34, %c0_35] : memref<128x128xf32, #tpu.memory_space<vmem>>, vector<128x128xf32>
    %cst_36 = arith.constant dense<0.000000e+00> : vector<16x128xf32>
    %38 = tpu.matmul %34, %37, %cst_36 {dimension_numbers = #tpu.dot_dimension_numbers<[1], [0], [0], [1], [0, 0, 1, 1], [], []>} : vector<16x128xf32>, vector<128x128xf32>, vector<16x128xf32> -> vector<16x128xf32>
    %39 = arith.addf %36, %38 : vector<16x128xf32>
    %c0_37 = arith.constant 0 : index
    %c0_38 = arith.constant 0 : index
    %40 = vector.load %arg9[%c0_37, %c0_38] : memref<1x128xf32, #tpu.memory_space<vmem>>, vector<1x128xf32>
    %41 = vector.broadcast %40 : vector<1x128xf32> to vector<16x128xf32>
    %42 = arith.addf %39, %41 : vector<16x128xf32>
    %cst_39 = arith.constant 0.000000e+00 : f32
    %43 = vector.broadcast %cst_39 : f32 to vector<16x128xf32>
    %44 = arith.maximumf %42, %43 : vector<16x128xf32>
    %c0_40 = arith.constant 0 : index
    %c0_41 = arith.constant 0 : index
    %45 = vector.load %arg10[%c0_40, %c0_41] : memref<16x128xf32, #tpu.memory_space<vmem>>, vector<16x128xf32>
    tpu.vector_store %arg10[%c0_40, %c0_41], %44 {strides = array<i32>} : memref<16x128xf32, #tpu.memory_space<vmem>>, vector<16x128xf32>,
    return
  }
  func.func @transform_0(%arg0: i32) -> (i32, i32) {
    %c0_i32 = arith.constant 0 : i32
    %c0_i32_0 = arith.constant 0 : i32
    return %arg0, %c0_i32 : i32, i32
  }
  func.func @transform_1(%arg0: i32) -> (i32, i32) {
    %c0_i32 = arith.constant 0 : i32
    %c0_i32_0 = arith.constant 0 : i32
    %c0_i32_1 = arith.constant 0 : i32
    return %c0_i32, %c0_i32_0 : i32, i32
  }
  func.func @transform_2(%arg0: i32) -> (i32, i32) {
    %c0_i32 = arith.constant 0 : i32
    %c0_i32_0 = arith.constant 0 : i32
    %c0_i32_1 = arith.constant 0 : i32
    return %c0_i32, %c0_i32_0 : i32, i32
  }
  func.func @transform_3(%arg0: i32) -> (i32, i32) {
    %c0_i32 = arith.constant 0 : i32
    %c0_i32_0 = arith.constant 0 : i32
    %c0_i32_1 = arith.constant 0 : i32
    return %c0_i32, %c0_i32_0 : i32, i32
  }
  func.func @transform_4(%arg0: i32) -> (i32, i32) {
    %c0_i32 = arith.constant 0 : i32
    %c0_i32_0 = arith.constant 0 : i32
    %c0_i32_1 = arith.constant 0 : i32
    return %c0_i32, %c0_i32_0 : i32, i32
  }
  func.func @transform_5(%arg0: i32) -> (i32, i32) {
    %c0_i32 = arith.constant 0 : i32
    %c0_i32_0 = arith.constant 0 : i32
    %c0_i32_1 = arith.constant 0 : i32
    return %c0_i32, %c0_i32_0 : i32, i32
  }
  func.func @transform_6(%arg0: i32) -> (i32, i32) {
    %c0_i32 = arith.constant 0 : i32
    %c0_i32_0 = arith.constant 0 : i32
    %c0_i32_1 = arith.constant 0 : i32
    return %c0_i32, %c0_i32_0 : i32, i32
  }
  func.func @transform_7(%arg0: i32) -> (i32, i32) {
    %c0_i32 = arith.constant 0 : i32
    %c0_i32_0 = arith.constant 0 : i32
    %c0_i32_1 = arith.constant 0 : i32
    return %c0_i32, %c0_i32_0 : i32, i32
  }
  func.func @transform_8(%arg0: i32) -> (i32, i32) {
    %c0_i32 = arith.constant 0 : i32
    %c0_i32_0 = arith.constant 0 : i32
    %c0_i32_1 = arith.constant 0 : i32
    return %c0_i32, %c0_i32_0 : i32, i32
  }
  func.func @transform_9(%arg0: i32) -> (i32, i32) {
    %c0_i32 = arith.constant 0 : i32
    %c0_i32_0 = arith.constant 0 : i32
    return %arg0, %c0_i32 : i32, i32
  }
}

</mosaic_0001>

<llo_original>
// kernel: ftb_forward.1
$region0: #{ftb_forward.1}
  #allocation0 [shape = 'u32[]', space=smem, size = 0x4, offset = 0x4, fixed_abs, tag = 'smem constant byte address 0x4 - core index']
  #allocation1 [shape = 'u32[144,128]{1,0:T(1,128)}', space=vmem, size = 0x12000, scoped, tag = 'internal scratch']
  %s0 = inlined_call_operand.vmem [shape: f32[32,128], index: 0, kind: input, shape index: {}]
  %s1 = inlined_call_operand.vmem [shape: f32[128,80], index: 1, kind: input, shape index: {}]
  %s2 = inlined_call_operand.vmem [shape: f32[1,80], index: 2, kind: input, shape index: {}]
  %s3 = inlined_call_operand.vmem [shape: f32[720,128], index: 3, kind: input, shape index: {}]
  %s4 = inlined_call_operand.vmem [shape: f32[1,128], index: 4, kind: input, shape index: {}]
  %s5 = inlined_call_operand.vmem [shape: f32[16,144], index: 5, kind: input, shape index: {}]
  %s6 = inlined_call_operand.vmem [shape: f32[128,128], index: 6, kind: input, shape index: {}]
  %s7 = inlined_call_operand.vmem [shape: f32[128,128], index: 7, kind: input, shape index: {}]
  %s8 = inlined_call_operand.vmem [shape: f32[1,128], index: 8, kind: input, shape index: {}]
  %s9 = inlined_call_operand.vmem [shape: f32[32,128], index: 9, kind: output, shape index: {}]
  %s10 = sld [smem:[#allocation0]]
  $region69: #{ftb_forward.1} parent=0
    _
  %s12 = ssub.s32 1, %s10
  %s13 = scalar_select 0, %s12, %s10
  loop: start=0, step=1, limit=4
  $region2: #{ftb_forward.1} parent=0 // loop_pre_header
    _
  $region3: #{ftb_forward.1} parent=0 // loop_header
    %s15 = sphi 0, %s19
    %p16 = scmp.ge.s32.totalorder %s15, 4
    %s25 = sphi 0, %s27
    %s28 = sphi 0, %s25
    %s29 = sphi 0, %s28
    %s45 = sphi 0, %s29
    %s49 = sphi 0, %s49
    %s51 = sphi 0, %s49
    %s52 = sphi 0, %s51
    %s66 = sphi 0, %s52
    %s70 = sphi 0, %s70
    %s72 = sphi 0, %s70
    %s73 = sphi 0, %s72
    %s87 = sphi 0, %s73
    %s91 = sphi 0, %s91
    %s93 = sphi 0, %s91
    %s94 = sphi 0, %s93
    %s108 = sphi 0, %s94
    %s112 = sphi 0, %s112
    %s114 = sphi 0, %s112
    %s115 = sphi 0, %s114
    %s129 = sphi 0, %s115
    %s133 = sphi 0, %s133
    %s135 = sphi 0, %s133
    %s136 = sphi 0, %s135
    %s150 = sphi 0, %s136
    %s154 = sphi 0, %s154
    %s156 = sphi 0, %s154
    %s157 = sphi 0, %s156
    %s171 = sphi 0, %s157
    %s175 = sphi 0, %s175
    %s177 = sphi 0, %s175
    %s178 = sphi 0, %s177
    %s192 = sphi 0, %s178
    %s196 = sphi 0, %s196
    %s198 = sphi 0, %s196
    %s199 = sphi 0, %s198
    %s213 = sphi 0, %s199
    %s219 = sphi 0, %s221
    %s222 = sphi 0, %s219
    %s223 = sphi 0, %s222
    %s239 = sphi 0, %s223
  $region4: #{ftb_forward.1} parent=0 // loop_header_branch
    %18 = sbr.rel (%p16) target = $region8
  $region5: #{ftb_forward.1} parent=0 // loop_body
    %s20 = ssub.s32 %s15, 1
    %s21 = ssub.s32 %s15, 2
    %s22 = sadd.s32 %s15, 1
    %s23 = ssub.s32 %s15, %s22
    %p24 = scmp.eq.s32.totalorder %s23, 0
    %s26 = sadd.s32 %s25, 1
    %s27 = scalar_select %p24, %s25, %s26
    %p30 = pneg %p24
    %p31 = scmp.eq.s32.totalorder %s15, 1
    %p32 = por %p30, %p31
    %p33 = scmp.ne.s32.totalorder %s25, %s28
    %p34 = scmp.eq.s32.totalorder %s15, 0
    %p35 = por %p33, %p34
    %p36 = scmp.ne.s32.totalorder %s25, %s28
    %p37 = scmp.eq.s32.totalorder %s20, 1
    %p38 = por %p36, %p37
    %p39 = scmp.ne.s32.totalorder %s28, %s29
    %p40 = scmp.eq.s32.totalorder %s20, 0
    %p41 = por %p39, %p40
    %p42 = scmp.ne.s32.totalorder %s28, %s29
    %p43 = scmp.eq.s32.totalorder %s21, 1
    %p44 = por %p42, %p43
    %p46 = scmp.ne.s32.totalorder %s29, %s45
    %p47 = scmp.eq.s32.totalorder %s21, 0
    %p48 = por %p46, %p47
    %s50 = sadd.s32 %s49, 1
    %p53 = scmp.eq.s32.totalorder %s15, 1
    %p54 = scmp.ne.s32.totalorder %s49, %s51
    %p55 = scmp.eq.s32.totalorder %s15, 0
    %p56 = por %p54, %p55
    %p57 = scmp.ne.s32.totalorder %s49, %s51
    %p58 = scmp.eq.s32.totalorder %s20, 1
    %p59 = por %p57, %p58
    %p60 = scmp.ne.s32.totalorder %s51, %s52
    %p61 = scmp.eq.s32.totalorder %s20, 0
    %p62 = por %p60, %p61
    %p63 = scmp.ne.s32.totalorder %s51, %s52
    %p64 = scmp.eq.s32.totalorder %s21, 1
    %p65 = por %p63, %p64
    %p67 = scmp.ne.s32.totalorder %s52, %s66
    %p68 = scmp.eq.s32.totalorder %s21, 0
    %p69 = por %p67, %p68
    %s71 = sadd.s32 %s70, 1
    %p74 = scmp.eq.s32.totalorder %s15, 1
    %p75 = scmp.ne.s32.totalorder %s70, %s72
    %p76 = scmp.eq.s32.totalorder %s15, 0
    %p77 = por %p75, %p76
    %p78 = scmp.ne.s32.totalorder %s70, %s72
    %p79 = scmp.eq.s32.totalorder %s20, 1
    %p80 = por %p78, %p79
    %p81 = scmp.ne.s32.totalorder %s72, %s73
    %p82 = scmp.eq.s32.totalorder %s20, 0
    %p83 = por %p81, %p82
    %p84 = scmp.ne.s32.totalorder %s72, %s73
    %p85 = scmp.eq.s32.totalorder %s21, 1
    %p86 = por %p84, %p85
    %p88 = scmp.ne.s32.totalorder %s73, %s87
    %p89 = scmp.eq.s32.totalorder %s21, 0
    %p90 = por %p88, %p89
    %s92 = sadd.s32 %s91, 1
    %p95 = scmp.eq.s32.totalorder %s15, 1
    %p96 = scmp.ne.s32.totalorder %s91, %s93
    %p97 = scmp.eq.s32.totalorder %s15, 0
    %p98 = por %p96, %p97
    %p99 = scmp.ne.s32.totalorder %s91, %s93
    %p100 = scmp.eq.s32.totalorder %s20, 1
    %p101 = por %p99, %p100
    %p102 = scmp.ne.s32.totalorder %s93, %s94
    %p103 = scmp.eq.s32.totalorder %s20, 0
    %p104 = por %p102, %p103
    %p105 = scmp.ne.s32.totalorder %s93, %s94
    %p106 = scmp.eq.s32.totalorder %s21, 1
    %p107 = por %p105, %p106
    %p109 = scmp.ne.s32.totalorder %s94, %s108
    %p110 = scmp.eq.s32.totalorder %s21, 0
    %p111 = por %p109, %p110
    %s113 = sadd.s32 %s112, 1
    %p116 = scmp.eq.s32.totalorder %s15, 1
    %p117 = scmp.ne.s32.totalorder %s112, %s114
    %p118 = scmp.eq.s32.totalorder %s15, 0
    %p119 = por %p117, %p118
    %p120 = scmp.ne.s32.totalorder %s112, %s114
    %p121 = scmp.eq.s32.totalorder %s20, 1
    %p122 = por %p120, %p121
    %p123 = scmp.ne.s32.totalorder %s114, %s115
    %p124 = scmp.eq.s32.totalorder %s20, 0
    %p125 = por %p123, %p124
    %p126 = scmp.ne.s32.totalorder %s114, %s115
    %p127 = scmp.eq.s32.totalorder %s21, 1
    %p128 = por %p126, %p127
    %p130 = scmp.ne.s32.totalorder %s115, %s129
    %p131 = scmp.eq.s32.totalorder %s21, 0
    %p132 = por %p130, %p131
    %s134 = sadd.s32 %s133, 1
    %p137 = scmp.eq.s32.totalorder %s15, 1
    %p138 = scmp.ne.s32.totalorder %s133, %s135
    %p139 = scmp.eq.s32.totalorder %s15, 0
    %p140 = por %p138, %p139
    %p141 = scmp.ne.s32.totalorder %s133, %s135
    %p142 = scmp.eq.s32.totalorder %s20, 1
    %p143 = por %p141, %p142
    %p144 = scmp.ne.s32.totalorder %s135, %s136
    %p145 = scmp.eq.s32.totalorder %s20, 0
    %p146 = por %p144, %p145
    %p147 = scmp.ne.s32.totalorder %s135, %s136
    %p148 = scmp.eq.s32.totalorder %s21, 1
    %p149 = por %p147, %p148
    %p151 = scmp.ne.s32.totalorder %s136, %s150
    %p152 = scmp.eq.s32.totalorder %s21, 0
    %p153 = por %p151, %p152
    %s155 = sadd.s32 %s154, 1
    %p158 = scmp.eq.s32.totalorder %s15, 1
    %p159 = scmp.ne.s32.totalorder %s154, %s156
    %p160 = scmp.eq.s32.totalorder %s15, 0
    %p161 = por %p159, %p160
    %p162 = scmp.ne.s32.totalorder %s154, %s156
    %p163 = scmp.eq.s32.totalorder %s20, 1
    %p164 = por %p162, %p163
    %p165 = scmp.ne.s32.totalorder %s156, %s157
    %p166 = scmp.eq.s32.totalorder %s20, 0
    %p167 = por %p165, %p166
    %p168 = scmp.ne.s32.totalorder %s156, %s157
    %p169 = scmp.eq.s32.totalorder %s21, 1
    %p170 = por %p168, %p169
    %p172 = scmp.ne.s32.totalorder %s157, %s171
    %p173 = scmp.eq.s32.totalorder %s21, 0
    %p174 = por %p172, %p173
    %s176 = sadd.s32 %s175, 1
    %p179 = scmp.eq.s32.totalorder %s15, 1
    %p180 = scmp.ne.s32.totalorder %s175, %s177
    %p181 = scmp.eq.s32.totalorder %s15, 0
    %p182 = por %p180, %p181
    %p183 = scmp.ne.s32.totalorder %s175, %s177
    %p184 = scmp.eq.s32.totalorder %s20, 1
    %p185 = por %p183, %p184
    %p186 = scmp.ne.s32.totalorder %s177, %s178
    %p187 = scmp.eq.s32.totalorder %s20, 0
    %p188 = por %p186, %p187
    %p189 = scmp.ne.s32.totalorder %s177, %s178
    %p190 = scmp.eq.s32.totalorder %s21, 1
    %p191 = por %p189, %p190
    %p193 = scmp.ne.s32.totalorder %s178, %s192
    %p194 = scmp.eq.s32.totalorder %s21, 0
    %p195 = por %p193, %p194
    %s197 = sadd.s32 %s196, 1
    %p200 = scmp.eq.s32.totalorder %s15, 1
    %p201 = scmp.ne.s32.totalorder %s196, %s198
    %p202 = scmp.eq.s32.totalorder %s15, 0
    %p203 = por %p201, %p202
    %p204 = scmp.ne.s32.totalorder %s196, %s198
    %p205 = scmp.eq.s32.totalorder %s20, 1
    %p206 = por %p204, %p205
    %p207 = scmp.ne.s32.totalorder %s198, %s199
    %p208 = scmp.eq.s32.totalorder %s20, 0
    %p209 = por %p207, %p208
    %p210 = scmp.ne.s32.totalorder %s198, %s199
    %p211 = scmp.eq.s32.totalorder %s21, 1
    %p212 = por %p210, %p211
    %p214 = scmp.ne.s32.totalorder %s199, %s213
    %p215 = scmp.eq.s32.totalorder %s21, 0
    %p216 = por %p214, %p215
    %s217 = ssub.s32 %s15, %s22
    %p218 = scmp.eq.s32.totalorder %s217, 0
    %s220 = sadd.s32 %s219, 1
    %s221 = scalar_select %p218, %s219, %s220
    %p224 = pneg %p218
    %p225 = scmp.eq.s32.totalorder %s15, 1
    %p226 = por %p224, %p225
    %p227 = scmp.ne.s32.totalorder %s219, %s222
    %p228 = scmp.eq.s32.totalorder %s15, 0
    %p229 = por %p227, %p228
    %p230 = scmp.ne.s32.totalorder %s219, %s222
    %p231 = scmp.eq.s32.totalorder %s20, 1
    %p232 = por %p230, %p231
    %p233 = scmp.ne.s32.totalorder %s222, %s223
    %p234 = scmp.eq.s32.totalorder %s20, 0
    %p235 = por %p233, %p234
    %p236 = scmp.ne.s32.totalorder %s222, %s223
    %p237 = scmp.eq.s32.totalorder %s21, 1
    %p238 = por %p236, %p237
    %p240 = scmp.ne.s32.totalorder %s223, %s239
    %p241 = scmp.eq.s32.totalorder %s21, 0
    %p242 = por %p240, %p241
    %p243 = scmp.le.s32.totalorder 1, %s15
    %p244 = scmp.lt.s32.totalorder %s15, 3
    %p245 = pnand %p243, %p244
    %p246 = pneg %p245
    // Predicated region
    $region9: #{ftb_forward.1} parent=5 // pred_check
      _
    $region10: #{ftb_forward.1} parent=5 // pred_check_branch
      %248 = sbr.rel (%p245) target = $region12
    $region11: #{ftb_forward.1} parent=5 // pred_region
      %s249 = ssub.s32 %s15, 1
      // Predicated region
      $region13: #{ftb_forward.1} parent=11 // pred_check
        %p250 = pneg %p62
      $region14: #{ftb_forward.1} parent=11 // pred_check_branch
        %252 = sbr.rel (%p250) target = $region16
      $region15: #{ftb_forward.1} parent=11 // pred_region
        _
      $region16: #{ftb_forward.1} parent=11 // pred_fallthru
        _
      // Predicated region
      $region17: #{ftb_forward.1} parent=11 // pred_check
        %p253 = pneg %p83
      $region18: #{ftb_forward.1} parent=11 // pred_check_branch
        %255 = sbr.rel (%p253) target = $region20
      $region19: #{ftb_forward.1} parent=11 // pred_region
        _
      $region20: #{ftb_forward.1} parent=11 // pred_fallthru
        _
      // Predicated region
      $region21: #{ftb_forward.1} parent=11 // pred_check
        %p256 = pneg %p104
      $region22: #{ftb_forward.1} parent=11 // pred_check_branch
        %258 = sbr.rel (%p256) target = $region24
      $region23: #{ftb_forward.1} parent=11 // pred_region
        _
      $region24: #{ftb_forward.1} parent=11 // pred_fallthru
        _
      // Predicated region
      $region25: #{ftb_forward.1} parent=11 // pred_check
        %p259 = pneg %p125
      $region26: #{ftb_forward.1} parent=11 // pred_check_branch
        %261 = sbr.rel (%p259) target = $region28
      $region27: #{ftb_forward.1} parent=11 // pred_region
        _
      $region28: #{ftb_forward.1} parent=11 // pred_fallthru
        _
      // Predicated region
      $region29: #{ftb_forward.1} parent=11 // pred_check
        %p262 = pneg %p146
      $region30: #{ftb_forward.1} parent=11 // pred_check_branch
        %264 = sbr.rel (%p262) target = $region32
      $region31: #{ftb_forward.1} parent=11 // pred_region
        _
      $region32: #{ftb_forward.1} parent=11 // pred_fallthru
        _
      // Predicated region
      $region33: #{ftb_forward.1} parent=11 // pred_check
        %p265 = pneg %p167
      $region34: #{ftb_forward.1} parent=11 // pred_check_branch
        %267 = sbr.rel (%p265) target = $region36
      $region35: #{ftb_forward.1} parent=11 // pred_region
        _
      $region36: #{ftb_forward.1} parent=11 // pred_fallthru
        _
      // Predicated region
      $region37: #{ftb_forward.1} parent=11 // pred_check
        %p268 = pneg %p188
      $region38: #{ftb_forward.1} parent=11 // pred_check_branch
        %270 = sbr.rel (%p268) target = $region40
      $region39: #{ftb_forward.1} parent=11 // pred_region
        _
      $region40: #{ftb_forward.1} parent=11 // pred_fallthru
        _
      // Predicated region
      $region41: #{ftb_forward.1} parent=11 // pred_check
        %p271 = pneg %p209
      $region42: #{ftb_forward.1} parent=11 // pred_check_branch
        %273 = sbr.rel (%p271) target = $region44
      $region43: #{ftb_forward.1} parent=11 // pred_region
        _
      $region44: #{ftb_forward.1} parent=11 // pred_fallthru
        _
    $region12: #{ftb_forward.1} parent=5 // pred_fallthru
      _
    %p274 = scmp.lt.s32.totalorder %s15, 2
    // Predicated region
    $region45: #{ftb_forward.1} parent=5 // pred_check
      %p275 = pneg %p274
    $region46: #{ftb_forward.1} parent=5 // pred_check_branch
      %277 = sbr.rel (%p275) target = $region48
    $region47: #{ftb_forward.1} parent=5 // pred_region
      // Predicated region
      $region49: #{ftb_forward.1} parent=47 // pred_check
        %p278 = pneg %p35
      $region50: #{ftb_forward.1} parent=47 // pred_check_branch
        %280 = sbr.rel (%p278) target = $region52
      $region51: #{ftb_forward.1} parent=47 // pred_region
        %s281 = smul.u32 2, %s15
        %p282 = scmp.lt.s32.totalorder %s281, 3
        %s283 = scalar_select %p282, %s281, 3
        %s284 = smul.addr %s283, 8
        %s285 = scalar_lea.vmem %s0, %s284
        %s286 = smul.u32 2, %s15
      $region52: #{ftb_forward.1} parent=47 // pred_fallthru
        _
    $region48: #{ftb_forward.1} parent=5 // pred_fallthru
      _
    %p287 = scmp.le.s32.totalorder 1, %s15
    %p288 = scmp.lt.s32.totalorder %s15, 3
    %p289 = pnand %p287, %p288
    %p290 = pneg %p289
    // Predicated region
    $region53: #{ftb_forward.1} parent=5 // pred_check
      _
    $region54: #{ftb_forward.1} parent=5 // pred_check_branch
      %292 = sbr.rel (%p289) target = $region56
    $region55: #{ftb_forward.1} parent=5 // pred_region
      %s293 = ssub.s32 %s15, 1
      %s294 = smul.u32 2, %s20
      %p295 = scmp.lt.s32.totalorder %s294, 3
      %s296 = scalar_select %p295, %s294, 3
      %s297 = smul.addr %s296, 8
      %s298 = scalar_lea.vmem %s0, %s297
      %p299 = pneg %p41
      %p300 = pneg %p38
      %p301 = pneg %p62
      %p302 = pneg %p59
      %p303 = pneg %p83
      %p304 = pneg %p80
      %p305 = pneg %p104
      %p306 = pneg %p101
      %p307 = pneg %p125
      %p308 = pneg %p122
      %p309 = pneg %p146
      %p310 = pneg %p143
      %p311 = pneg %p167
      %p312 = pneg %p164
      %p313 = pneg %p188
      %p314 = pneg %p185
      %p315 = pneg %p209
      %p316 = pneg %p206
      %p317 = pneg %p235
      %p318 = pneg %p232
      %s319 = smul.u32 2, %s20
      %p320 = scmp.lt.s32.totalorder %s319, 3
      %s321 = scalar_select %p320, %s319, 3
      %s322 = smul.addr %s321, 8
      %s323 = scalar_lea.vmem %s9, %s322
      %s324 = smul.u32 2, %s20
      %p325 = scmp.lt.s32.totalorder %s324, 3
      %s326 = scalar_select %p325, %s324, 3
      %s327 = smul.addr %s326, 8
      %s328 = scalar_lea.vmem %s0, %s327
      %s329 = smul.u32 2, %s20
      %s330 = smul.u32 2, %s20
      %p331 = scmp.lt.s32.totalorder %s330, 3
      %s332 = scalar_select %p331, %s330, 3
      %s333 = smul.addr %s332, 8
      %s334 = scalar_lea.vmem %s9, %s333
      %s335 = smul.u32 2, %s20
      %v336 = vld [vmem:[%s328] sm:$0xff]
      %v337 = vld [vmem:[%s328 + $0x8] sm:$0xff]
      %v338 = vld [vmem:[%s1] sm:$0xff]
      %v339 = vld [vmem:[%s1 + $0x8] sm:$0xff]
      %v340 = vld [vmem:[%s1 + $0x10] sm:$0xff]
      %v341 = vld [vmem:[%s1 + $0x18] sm:$0xff]
      %v342 = vld [vmem:[%s1 + $0x20] sm:$0xff]
      %v343 = vld [vmem:[%s1 + $0x28] sm:$0xff]
      %v344 = vld [vmem:[%s1 + $0x30] sm:$0xff]
      %v345 = vld [vmem:[%s1 + $0x38] sm:$0xff]
      %v346 = vld [vmem:[%s1 + $0x40] sm:$0xff]
      %v347 = vld [vmem:[%s1 + $0x48] sm:$0xff]
      %v348 = vld [vmem:[%s1 + $0x50] sm:$0xff]
      %v349 = vld [vmem:[%s1 + $0x58] sm:$0xff]
      %v350 = vld [vmem:[%s1 + $0x60] sm:$0xff]
      %v351 = vld [vmem:[%s1 + $0x68] sm:$0xff]
      %v352 = vld [vmem:[%s1 + $0x70] sm:$0xff]
      %v353 = vld [vmem:[%s1 + $0x78] sm:$0xff]
      %v354 = vld [vmem:[%s2] sm:$0x1]
      %v356 = vlaneseq
      %v357 = vshrl.u32 %v356, 7
      %v358 = vsub.s32 0, %v357
      %v359 = vrot.slane %v354, %v358
      %361 = vmatprep.subr.mxu0 0.0
      %362 = vmatpush1.msra.mxu0 %v353
      %363 = vmatprep.subr.mxu0 0.0
      %364 = vmatpush1.msra.mxu0 %v352
      %365 = vmatprep.subr.mxu0 0.0
      %366 = vmatpush1.msra.mxu0 %v351
      %367 = vmatprep.subr.mxu0 0.0
      %368 = vmatpush1.msra.mxu0 %v350
      %369 = vmatprep.subr.mxu0 0.0
      %370 = vmatpush1.msra.mxu0 %v349
      %371 = vmatprep.subr.mxu0 0.0
      %372 = vmatpush1.msra.mxu0 %v348
      %373 = vmatprep.subr.mxu0 0.0
      %374 = vmatpush1.msra.mxu0 %v347
      %375 = vmatprep.subr.mxu0 0.0
      %376 = vmatpush1.msra.mxu0 %v346
      %377 = vmatprep.subr.mxu0 0.0
      %378 = vmatpush1.msra.mxu0 %v345
      %379 = vmatprep.subr.mxu0 0.0
      %380 = vmatpush1.msra.mxu0 %v344
      %381 = vmatprep.subr.mxu0 0.0
      %382 = vmatpush1.msra.mxu0 %v343
      %383 = vmatprep.subr.mxu0 0.0
      %384 = vmatpush1.msra.mxu0 %v342
      %385 = vmatprep.subr.mxu0 0.0
      %386 = vmatpush1.msra.mxu0 %v341
      %387 = vmatprep.subr.mxu0 0.0
      %388 = vmatpush1.msra.mxu0 %v340
      %389 = vmatprep.subr.mxu0 0.0
      %390 = vmatpush1.msra.mxu0 %v339
      %391 = vmatprep.subr.mxu0 0.0
      %392 = vmatpush1.msra.mxu0 %v338
      %393 = vmatprep.subr.mxu0 0.0
      %394 = vmatpush2.msra.mxu0 0.0
      %395 = vmatprep.subr.mxu0 0.0
      %396 = vmatpush2.msra.mxu0 0.0
      %397 = vmatprep.subr.mxu0 0.0
      %398 = vmatpush2.msra.mxu0 0.0
      %399 = vmatprep.subr.mxu0 0.0
      %400 = vmatpush2.msra.mxu0 0.0
      %401 = vmatprep.subr.mxu0 0.0
      %402 = vmatpush2.msra.mxu0 0.0
      %403 = vmatprep.subr.mxu0 0.0
      %404 = vmatpush2.msra.mxu0 0.0
      %405 = vmatprep.subr.mxu0 0.0
      %406 = vmatpush2.msra.mxu0 0.0
      %407 = vmatprep.subr.mxu0 0.0
      %408 = vmatpush2.msra.mxu0 0.0
      %409 = vmatprep.subr.mxu0 0.0
      %410 = vmatpush2.msra.mxu0 0.0
      %411 = vmatprep.subr.mxu0 0.0
      %412 = vmatpush2.msra.mxu0 0.0
      %413 = vmatprep.subr.mxu0 0.0
      %414 = vmatpush2.msra.mxu0 0.0
      %415 = vmatprep.subr.mxu0 0.0
      %416 = vmatpush2.msra.mxu0 0.0
      %417 = vmatprep.subr.mxu0 0.0
      %418 = vmatpush2.msra.mxu0 0.0
      %419 = vmatprep.subr.mxu0 0.0
      %420 = vmatpush2.msra.mxu0 0.0
      %421 = vmatprep.subr.mxu0 0.0
      %422 = vmatpush2.msra.mxu0 0.0
      %423 = vmatprep.subr.mxu0 0.0
      %424 = vmatpush2.msra.mxu0 0.0
      %425 = vmatprep.mubr.f32.mxu0 0.0
      %426 = vmatmul.mubr.f32.gmra.mxu0 %v336
      %v427 = vpop.f32.mrf.mxu0
      %v428 = vadd.f32 %v359, %v427
      %v429 = vpop.f32.mrf.mxu0
      %430 = vmatprep.mubr.f32.mxu0 0.0
      %431 = vmatmul.mubr.f32.gmra.mxu0 %v337
      %v432 = vpop.f32.mrf.mxu0
      %v433 = vadd.f32 %v359, %v432
      %v434 = vpop.f32.mrf.mxu0
      %435 = vdwg.mxu0
      %v436 = vmax.f32 %v428, 0.0
      %v437 = vmax.f32 %v433, 0.0
      %v438 = vld [vmem:[%s3] sm:$0xff]
      %v439 = vld [vmem:[%s3 + $0x8] sm:$0xff]
      %v440 = vld [vmem:[%s3 + $0x10] sm:$0xff]
      %v441 = vld [vmem:[%s3 + $0x18] sm:$0xff]
      %v442 = vld [vmem:[%s3 + $0x20] sm:$0xff]
      %v443 = vld [vmem:[%s3 + $0x28] sm:$0xff]
      %v444 = vld [vmem:[%s3 + $0x30] sm:$0xff]
      %v445 = vld [vmem:[%s3 + $0x38] sm:$0xff]
      %v446 = vld [vmem:[%s3 + $0x40] sm:$0xff]
      %v447 = vld [vmem:[%s3 + $0x48] sm:$0xff]
      %vm448 = vcmask 654336
      %v450 = vsel %vm448, %v436, 0
      %v453 = vsel %vm448, %v437, 0
      %455 = vmatprep.subr.mxu0 0.0
      %456 = vmatpush1.msra.mxu0 0.0
      %457 = vmatprep.subr.mxu0 0.0
      %458 = vmatpush1.msra.mxu0 0.0
      %459 = vmatprep.subr.mxu0 0.0
      %460 = vmatpush1.msra.mxu0 0.0
      %461 = vmatprep.subr.mxu0 0.0
      %462 = vmatpush1.msra.mxu0 0.0
      %463 = vmatprep.subr.mxu0 0.0
      %464 = vmatpush1.msra.mxu0 0.0
      %465 = vmatprep.subr.mxu0 0.0
      %466 = vmatpush1.msra.mxu0 0.0
      %467 = vmatprep.subr.mxu0 0.0
      %468 = vmatpush1.msra.mxu0 %v447
      %469 = vmatprep.subr.mxu0 0.0
      %470 = vmatpush1.msra.mxu0 %v446
      %471 = vmatprep.subr.mxu0 0.0
      %472 = vmatpush1.msra.mxu0 %v445
      %473 = vmatprep.subr.mxu0 0.0
      %474 = vmatpush1.msra.mxu0 %v444
      %475 = vmatprep.subr.mxu0 0.0
      %476 = vmatpush1.msra.mxu0 %v443
      %477 = vmatprep.subr.mxu0 0.0
      %478 = vmatpush1.msra.mxu0 %v442
      %479 = vmatprep.subr.mxu0 0.0
      %480 = vmatpush1.msra.mxu0 %v441
      %481 = vmatprep.subr.mxu0 0.0
      %482 = vmatpush1.msra.mxu0 %v440
      %483 = vmatprep.subr.mxu0 0.0
      %484 = vmatpush1.msra.mxu0 %v439
      %485 = vmatprep.subr.mxu0 0.0
      %486 = vmatpush1.msra.mxu0 %v438
      %487 = vmatprep.subr.mxu0 0.0
      %488 = vmatpush2.msra.mxu0 0.0
      %489 = vmatprep.subr.mxu0 0.0
      %490 = vmatpush2.msra.mxu0 0.0
      %491 = vmatprep.subr.mxu0 0.0
      %492 = vmatpush2.msra.mxu0 0.0
      %493 = vmatprep.subr.mxu0 0.0
      %494 = vmatpush2.msra.mxu0 0.0
      %495 = vmatprep.subr.mxu0 0.0
      %496 = vmatpush2.msra.mxu0 0.0
      %497 = vmatprep.subr.mxu0 0.0
      %498 = vmatpush2.msra.mxu0 0.0
      %499 = vmatprep.subr.mxu0 0.0
      %500 = vmatpush2.msra.mxu0 0.0
      %501 = vmatprep.subr.mxu0 0.0
      %502 = vmatpush2.msra.mxu0 0.0
      %503 = vmatprep.subr.mxu0 0.0
      %504 = vmatpush2.msra.mxu0 0.0
      %505 = vmatprep.subr.mxu0 0.0
      %506 = vmatpush2.msra.mxu0 0.0
      %507 = vmatprep.subr.mxu0 0.0
      %508 = vmatpush2.msra.mxu0 0.0
      %509 = vmatprep.subr.mxu0 0.0
      %510 = vmatpush2.msra.mxu0 0.0
      %511 = vmatprep.subr.mxu0 0.0
      %512 = vmatpush2.msra.mxu0 0.0
      %513 = vmatprep.subr.mxu0 0.0
      %514 = vmatpush2.msra.mxu0 0.0
      %515 = vmatprep.subr.mxu0 0.0
      %516 = vmatpush2.msra.mxu0 0.0
      %517 = vmatprep.subr.mxu0 0.0
      %518 = vmatpush2.msra.mxu0 0.0
      %519 = vmatprep.mubr.f32.mxu0 0.0
      %520 = vmatmul.mubr.f32.gmra.mxu0 %v450
      %v521 = vpop.f32.mrf.mxu0
      %v522 = vadd.f32 0.0, %v521
      %v523 = vpop.f32.mrf.mxu0
      %524 = vmatprep.mubr.f32.mxu0 0.0
      %525 = vmatmul.mubr.f32.gmra.mxu0 %v453
      %v526 = vpop.f32.mrf.mxu0
      %v527 = vadd.f32 0.0, %v526
      %v528 = vpop.f32.mrf.mxu0
      %529 = vdwg.mxu0
      %v530 = vld [vmem:[%s3 + $0x50] sm:$0xff]
      %v531 = vld [vmem:[%s3 + $0x58] sm:$0xff]
      %v532 = vld [vmem:[%s3 + $0x60] sm:$0xff]
      %v533 = vld [vmem:[%s3 + $0x68] sm:$0xff]
      %v534 = vld [vmem:[%s3 + $0x70] sm:$0xff]
      %v535 = vld [vmem:[%s3 + $0x78] sm:$0xff]
      %v536 = vld [vmem:[%s3 + $0x80] sm:$0xff]
      %v537 = vld [vmem:[%s3 + $0x88] sm:$0xff]
      %v538 = vld [vmem:[%s3 + $0x90] sm:$0xff]
      %v539 = vld [vmem:[%s3 + $0x98] sm:$0xff]
      %540 = vmatprep.subr.mxu0 0.0
      %541 = vmatpush1.msra.mxu0 0.0
      %542 = vmatprep.subr.mxu0 0.0
      %543 = vmatpush1.msra.mxu0 0.0
      %544 = vmatprep.subr.mxu0 0.0
      %545 = vmatpush1.msra.mxu0 0.0
      %546 = vmatprep.subr.mxu0 0.0
      %547 = vmatpush1.msra.mxu0 0.0
      %548 = vmatprep.subr.mxu0 0.0
      %549 = vmatpush1.msra.mxu0 0.0
      %550 = vmatprep.subr.mxu0 0.0
      %551 = vmatpush1.msra.mxu0 0.0
      %552 = vmatprep.subr.mxu0 0.0
      %553 = vmatpush1.msra.mxu0 %v539
      %554 = vmatprep.subr.mxu0 0.0
      %555 = vmatpush1.msra.mxu0 %v538
      %556 = vmatprep.subr.mxu0 0.0
      %557 = vmatpush1.msra.mxu0 %v537
      %558 = vmatprep.subr.mxu0 0.0
      %559 = vmatpush1.msra.mxu0 %v536
      %560 = vmatprep.subr.mxu0 0.0
      %561 = vmatpush1.msra.mxu0 %v535
      %562 = vmatprep.subr.mxu0 0.0
      %563 = vmatpush1.msra.mxu0 %v534
      %564 = vmatprep.subr.mxu0 0.0
      %565 = vmatpush1.msra.mxu0 %v533
      %566 = vmatprep.subr.mxu0 0.0
      %567 = vmatpush1.msra.mxu0 %v532
      %568 = vmatprep.subr.mxu0 0.0
      %569 = vmatpush1.msra.mxu0 %v531
      %570 = vmatprep.subr.mxu0 0.0
      %571 = vmatpush1.msra.mxu0 %v530
      %572 = vmatprep.subr.mxu0 0.0
      %573 = vmatpush2.msra.mxu0 0.0
      %574 = vmatprep.subr.mxu0 0.0
      %575 = vmatpush2.msra.mxu0 0.0
      %576 = vmatprep.subr.mxu0 0.0
      %577 = vmatpush2.msra.mxu0 0.0
      %578 = vmatprep.subr.mxu0 0.0
      %579 = vmatpush2.msra.mxu0 0.0
      %580 = vmatprep.subr.mxu0 0.0
      %581 = vmatpush2.msra.mxu0 0.0
      %582 = vmatprep.subr.mxu0 0.0
      %583 = vmatpush2.msra.mxu0 0.0
      %584 = vmatprep.subr.mxu0 0.0
      %585 = vmatpush2.msra.mxu0 0.0
      %586 = vmatprep.subr.mxu0 0.0
      %587 = vmatpush2.msra.mxu0 0.0
      %588 = vmatprep.subr.mxu0 0.0
      %589 = vmatpush2.msra.mxu0 0.0
      %590 = vmatprep.subr.mxu0 0.0
      %591 = vmatpush2.msra.mxu0 0.0
      %592 = vmatprep.subr.mxu0 0.0
      %593 = vmatpush2.msra.mxu0 0.0
      %594 = vmatprep.subr.mxu0 0.0
      %595 = vmatpush2.msra.mxu0 0.0
      %596 = vmatprep.subr.mxu0 0.0
      %597 = vmatpush2.msra.mxu0 0.0
      %598 = vmatprep.subr.mxu0 0.0
      %599 = vmatpush2.msra.mxu0 0.0
      %600 = vmatprep.subr.mxu0 0.0
      %601 = vmatpush2.msra.mxu0 0.0
      %602 = vmatprep.subr.mxu0 0.0
      %603 = vmatpush2.msra.mxu0 0.0
      %604 = vmatprep.mubr.f32.mxu0 0.0
      %605 = vmatmul.mubr.f32.gmra.mxu0 %v450
      %v606 = vpop.f32.mrf.mxu0
      %v607 = vadd.f32 0.0, %v606
      %v608 = vpop.f32.mrf.mxu0
      %609 = vmatprep.mubr.f32.mxu0 0.0
      %610 = vmatmul.mubr.f32.gmra.mxu0 %v453
      %v611 = vpop.f32.mrf.mxu0
      %v612 = vadd.f32 0.0, %v611
      %v613 = vpop.f32.mrf.mxu0
      %614 = vdwg.mxu0
      %v615 = vld [vmem:[%s3 + $0xa0] sm:$0xff]
      %v616 = vld [vmem:[%s3 + $0xa8] sm:$0xff]
      %v617 = vld [vmem:[%s3 + $0xb0] sm:$0xff]
      %v618 = vld [vmem:[%s3 + $0xb8] sm:$0xff]
      %v619 = vld [vmem:[%s3 + $0xc0] sm:$0xff]
      %v620 = vld [vmem:[%s3 + $0xc8] sm:$0xff]
      %v621 = vld [vmem:[%s3 + $0xd0] sm:$0xff]
      %v622 = vld [vmem:[%s3 + $0xd8] sm:$0xff]
      %v623 = vld [vmem:[%s3 + $0xe0] sm:$0xff]
      %v624 = vld [vmem:[%s3 + $0xe8] sm:$0xff]
      %625 = vmatprep.subr.mxu0 0.0
      %626 = vmatpush1.msra.mxu0 0.0
      %627 = vmatprep.subr.mxu0 0.0
      %628 = vmatpush1.msra.mxu0 0.0
      %629 = vmatprep.subr.mxu0 0.0
      %630 = vmatpush1.msra.mxu0 0.0
      %631 = vmatprep.subr.mxu0 0.0
      %632 = vmatpush1.msra.mxu0 0.0
      %633 = vmatprep.subr.mxu0 0.0
      %634 = vmatpush1.msra.mxu0 0.0
      %635 = vmatprep.subr.mxu0 0.0
      %636 = vmatpush1.msra.mxu0 0.0
      %637 = vmatprep.subr.mxu0 0.0
      %638 = vmatpush1.msra.mxu0 %v624
      %639 = vmatprep.subr.mxu0 0.0
      %640 = vmatpush1.msra.mxu0 %v623
      %641 = vmatprep.subr.mxu0 0.0
      %642 = vmatpush1.msra.mxu0 %v622
      %643 = vmatprep.subr.mxu0 0.0
      %644 = vmatpush1.msra.mxu0 %v621
      %645 = vmatprep.subr.mxu0 0.0
      %646 = vmatpush1.msra.mxu0 %v620
      %647 = vmatprep.subr.mxu0 0.0
      %648 = vmatpush1.msra.mxu0 %v619
      %649 = vmatprep.subr.mxu0 0.0
      %650 = vmatpush1.msra.mxu0 %v618
      %651 = vmatprep.subr.mxu0 0.0
      %652 = vmatpush1.msra.mxu0 %v617
      %653 = vmatprep.subr.mxu0 0.0
      %654 = vmatpush1.msra.mxu0 %v616
      %655 = vmatprep.subr.mxu0 0.0
      %656 = vmatpush1.msra.mxu0 %v615
      %657 = vmatprep.subr.mxu0 0.0
      %658 = vmatpush2.msra.mxu0 0.0
      %659 = vmatprep.subr.mxu0 0.0
      %660 = vmatpush2.msra.mxu0 0.0
      %661 = vmatprep.subr.mxu0 0.0
      %662 = vmatpush2.msra.mxu0 0.0
      %663 = vmatprep.subr.mxu0 0.0
      %664 = vmatpush2.msra.mxu0 0.0
      %665 = vmatprep.subr.mxu0 0.0
      %666 = vmatpush2.msra.mxu0 0.0
      %667 = vmatprep.subr.mxu0 0.0
      %668 = vmatpush2.msra.mxu0 0.0
      %669 = vmatprep.subr.mxu0 0.0
      %670 = vmatpush2.msra.mxu0 0.0
      %671 = vmatprep.subr.mxu0 0.0
      %672 = vmatpush2.msra.mxu0 0.0
      %673 = vmatprep.subr.mxu0 0.0
      %674 = vmatpush2.msra.mxu0 0.0
      %675 = vmatprep.subr.mxu0 0.0
      %676 = vmatpush2.msra.mxu0 0.0
      %677 = vmatprep.subr.mxu0 0.0
      %678 = vmatpush2.msra.mxu0 0.0
      %679 = vmatprep.subr.mxu0 0.0
      %680 = vmatpush2.msra.mxu0 0.0
      %681 = vmatprep.subr.mxu0 0.0
      %682 = vmatpush2.msra.mxu0 0.0
      %683 = vmatprep.subr.mxu0 0.0
      %684 = vmatpush2.msra.mxu0 0.0
      %685 = vmatprep.subr.mxu0 0.0
      %686 = vmatpush2.msra.mxu0 0.0
      %687 = vmatprep.subr.mxu0 0.0
      %688 = vmatpush2.msra.mxu0 0.0
      %689 = vmatprep.mubr.f32.mxu0 0.0
      %690 = vmatmul.mubr.f32.gmra.mxu0 %v450
      %v691 = vpop.f32.mrf.mxu0
      %v692 = vadd.f32 0.0, %v691
      %v693 = vpop.f32.mrf.mxu0
      %694 = vmatprep.mubr.f32.mxu0 0.0
      %695 = vmatmul.mubr.f32.gmra.mxu0 %v453
      %v696 = vpop.f32.mrf.mxu0
      %v697 = vadd.f32 0.0, %v696
      %v698 = vpop.f32.mrf.mxu0
      %699 = vdwg.mxu0
      %v700 = vld [vmem:[%s3 + $0xf0] sm:$0xff]
      %v701 = vld [vmem:[%s3 + $0xf8] sm:$0xff]
      %v702 = vld [vmem:[%s3 + $0x100] sm:$0xff]
      %v703 = vld [vmem:[%s3 + $0x108] sm:$0xff]
      %v704 = vld [vmem:[%s3 + $0x110] sm:$0xff]
      %v705 = vld [vmem:[%s3 + $0x118] sm:$0xff]
      %v706 = vld [vmem:[%s3 + $0x120] sm:$0xff]
      %v707 = vld [vmem:[%s3 + $0x128] sm:$0xff]
      %v708 = vld [vmem:[%s3 + $0x130] sm:$0xff]
      %v709 = vld [vmem:[%s3 + $0x138] sm:$0xff]
      %710 = vmatprep.subr.mxu0 0.0
      %711 = vmatpush1.msra.mxu0 0.0
      %712 = vmatprep.subr.mxu0 0.0
      %713 = vmatpush1.msra.mxu0 0.0
      %714 = vmatprep.subr.mxu0 0.0
      %715 = vmatpush1.msra.mxu0 0.0
      %716 = vmatprep.subr.mxu0 0.0
      %717 = vmatpush1.msra.mxu0 0.0
      %718 = vmatprep.subr.mxu0 0.0
      %719 = vmatpush1.msra.mxu0 0.0
      %720 = vmatprep.subr.mxu0 0.0
      %721 = vmatpush1.msra.mxu0 0.0
      %722 = vmatprep.subr.mxu0 0.0
      %723 = vmatpush1.msra.mxu0 %v709
      %724 = vmatprep.subr.mxu0 0.0
      %725 = vmatpush1.msra.mxu0 %v708
      %726 = vmatprep.subr.mxu0 0.0
      %727 = vmatpush1.msra.mxu0 %v707
      %728 = vmatprep.subr.mxu0 0.0
      %729 = vmatpush1.msra.mxu0 %v706
      %730 = vmatprep.subr.mxu0 0.0
      %731 = vmatpush1.msra.mxu0 %v705
      %732 = vmatprep.subr.mxu0 0.0
      %733 = vmatpush1.msra.mxu0 %v704
      %734 = vmatprep.subr.mxu0 0.0
      %735 = vmatpush1.msra.mxu0 %v703
      %736 = vmatprep.subr.mxu0 0.0
      %737 = vmatpush1.msra.mxu0 %v702
      %738 = vmatprep.subr.mxu0 0.0
      %739 = vmatpush1.msra.mxu0 %v701
      %740 = vmatprep.subr.mxu0 0.0
      %741 = vmatpush1.msra.mxu0 %v700
      %742 = vmatprep.subr.mxu0 0.0
      %743 = vmatpush2.msra.mxu0 0.0
      %744 = vmatprep.subr.mxu0 0.0
      %745 = vmatpush2.msra.mxu0 0.0
      %746 = vmatprep.subr.mxu0 0.0
      %747 = vmatpush2.msra.mxu0 0.0
      %748 = vmatprep.subr.mxu0 0.0
      %749 = vmatpush2.msra.mxu0 0.0
      %750 = vmatprep.subr.mxu0 0.0
      %751 = vmatpush2.msra.mxu0 0.0
      %752 = vmatprep.subr.mxu0 0.0
      %753 = vmatpush2.msra.mxu0 0.0
      %754 = vmatprep.subr.mxu0 0.0
      %755 = vmatpush2.msra.mxu0 0.0
      %756 = vmatprep.subr.mxu0 0.0
      %757 = vmatpush2.msra.mxu0 0.0
      %758 = vmatprep.subr.mxu0 0.0
      %759 = vmatpush2.msra.mxu0 0.0
      %760 = vmatprep.subr.mxu0 0.0
      %761 = vmatpush2.msra.mxu0 0.0
      %762 = vmatprep.subr.mxu0 0.0
      %763 = vmatpush2.msra.mxu0 0.0
      %764 = vmatprep.subr.mxu0 0.0
      %765 = vmatpush2.msra.mxu0 0.0
      %766 = vmatprep.subr.mxu0 0.0
      %767 = vmatpush2.msra.mxu0 0.0
      %768 = vmatprep.subr.mxu0 0.0
      %769 = vmatpush2.msra.mxu0 0.0
      %770 = vmatprep.subr.mxu0 0.0
      %771 = vmatpush2.msra.mxu0 0.0
      %772 = vmatprep.subr.mxu0 0.0
      %773 = vmatpush2.msra.mxu0 0.0
      %774 = vmatprep.mubr.f32.mxu0 0.0
      %775 = vmatmul.mubr.f32.gmra.mxu0 %v450
      %v776 = vpop.f32.mrf.mxu0
      %v777 = vadd.f32 0.0, %v776
      %v778 = vpop.f32.mrf.mxu0
      %779 = vmatprep.mubr.f32.mxu0 0.0
      %780 = vmatmul.mubr.f32.gmra.mxu0 %v453
      %v781 = vpop.f32.mrf.mxu0
      %v782 = vadd.f32 0.0, %v781
      %v783 = vpop.f32.mrf.mxu0
      %784 = vdwg.mxu0
      %v785 = vld [vmem:[%s3 + $0x140] sm:$0xff]
      %v786 = vld [vmem:[%s3 + $0x148] sm:$0xff]
      %v787 = vld [vmem:[%s3 + $0x150] sm:$0xff]
      %v788 = vld [vmem:[%s3 + $0x158] sm:$0xff]
      %v789 = vld [vmem:[%s3 + $0x160] sm:$0xff]
      %v790 = vld [vmem:[%s3 + $0x168] sm:$0xff]
      %v791 = vld [vmem:[%s3 + $0x170] sm:$0xff]
      %v792 = vld [vmem:[%s3 + $0x178] sm:$0xff]
      %v793 = vld [vmem:[%s3 + $0x180] sm:$0xff]
      %v794 = vld [vmem:[%s3 + $0x188] sm:$0xff]
      %795 = vmatprep.subr.mxu0 0.0
      %796 = vmatpush1.msra.mxu0 0.0
      %797 = vmatprep.subr.mxu0 0.0
      %798 = vmatpush1.msra.mxu0 0.0
      %799 = vmatprep.subr.mxu0 0.0
      %800 = vmatpush1.msra.mxu0 0.0
      %801 = vmatprep.subr.mxu0 0.0
      %802 = vmatpush1.msra.mxu0 0.0
      %803 = vmatprep.subr.mxu0 0.0
      %804 = vmatpush1.msra.mxu0 0.0
      %805 = vmatprep.subr.mxu0 0.0
      %806 = vmatpush1.msra.mxu0 0.0
      %807 = vmatprep.subr.mxu0 0.0
      %808 = vmatpush1.msra.mxu0 %v794
      %809 = vmatprep.subr.mxu0 0.0
      %810 = vmatpush1.msra.mxu0 %v793
      %811 = vmatprep.subr.mxu0 0.0
      %812 = vmatpush1.msra.mxu0 %v792
      %813 = vmatprep.subr.mxu0 0.0
      %814 = vmatpush1.msra.mxu0 %v791
      %815 = vmatprep.subr.mxu0 0.0
      %816 = vmatpush1.msra.mxu0 %v790
      %817 = vmatprep.subr.mxu0 0.0
      %818 = vmatpush1.msra.mxu0 %v789
      %819 = vmatprep.subr.mxu0 0.0
      %820 = vmatpush1.msra.mxu0 %v788
      %821 = vmatprep.subr.mxu0 0.0
      %822 = vmatpush1.msra.mxu0 %v787
      %823 = vmatprep.subr.mxu0 0.0
      %824 = vmatpush1.msra.mxu0 %v786
      %825 = vmatprep.subr.mxu0 0.0
      %826 = vmatpush1.msra.mxu0 %v785
      %827 = vmatprep.subr.mxu0 0.0
      %828 = vmatpush2.msra.mxu0 0.0
      %829 = vmatprep.subr.mxu0 0.0
      %830 = vmatpush2.msra.mxu0 0.0
      %831 = vmatprep.subr.mxu0 0.0
      %832 = vmatpush2.msra.mxu0 0.0
      %833 = vmatprep.subr.mxu0 0.0
      %834 = vmatpush2.msra.mxu0 0.0
      %835 = vmatprep.subr.mxu0 0.0
      %836 = vmatpush2.msra.mxu0 0.0
      %837 = vmatprep.subr.mxu0 0.0
      %838 = vmatpush2.msra.mxu0 0.0
      %839 = vmatprep.subr.mxu0 0.0
      %840 = vmatpush2.msra.mxu0 0.0
      %841 = vmatprep.subr.mxu0 0.0
      %842 = vmatpush2.msra.mxu0 0.0
      %843 = vmatprep.subr.mxu0 0.0
      %844 = vmatpush2.msra.mxu0 0.0
      %845 = vmatprep.subr.mxu0 0.0
      %846 = vmatpush2.msra.mxu0 0.0
      %847 = vmatprep.subr.mxu0 0.0
      %848 = vmatpush2.msra.mxu0 0.0
      %849 = vmatprep.subr.mxu0 0.0
      %850 = vmatpush2.msra.mxu0 0.0
      %851 = vmatprep.subr.mxu0 0.0
      %852 = vmatpush2.msra.mxu0 0.0
      %853 = vmatprep.subr.mxu0 0.0
      %854 = vmatpush2.msra.mxu0 0.0
      %855 = vmatprep.subr.mxu0 0.0
      %856 = vmatpush2.msra.mxu0 0.0
      %857 = vmatprep.subr.mxu0 0.0
      %858 = vmatpush2.msra.mxu0 0.0
      %859 = vmatprep.mubr.f32.mxu0 0.0
      %860 = vmatmul.mubr.f32.gmra.mxu0 %v450
      %v861 = vpop.f32.mrf.mxu0
      %v862 = vadd.f32 0.0, %v861
      %v863 = vpop.f32.mrf.mxu0
      %864 = vmatprep.mubr.f32.mxu0 0.0
      %865 = vmatmul.mubr.f32.gmra.mxu0 %v453
      %v866 = vpop.f32.mrf.mxu0
      %v867 = vadd.f32 0.0, %v866
      %v868 = vpop.f32.mrf.mxu0
      %869 = vdwg.mxu0
      %v870 = vld [vmem:[%s3 + $0x190] sm:$0xff]
      %v871 = vld [vmem:[%s3 + $0x198] sm:$0xff]
      %v872 = vld [vmem:[%s3 + $0x1a0] sm:$0xff]
      %v873 = vld [vmem:[%s3 + $0x1a8] sm:$0xff]
      %v874 = vld [vmem:[%s3 + $0x1b0] sm:$0xff]
      %v875 = vld [vmem:[%s3 + $0x1b8] sm:$0xff]
      %v876 = vld [vmem:[%s3 + $0x1c0] sm:$0xff]
      %v877 = vld [vmem:[%s3 + $0x1c8] sm:$0xff]
      %v878 = vld [vmem:[%s3 + $0x1d0] sm:$0xff]
      %v879 = vld [vmem:[%s3 + $0x1d8] sm:$0xff]
      %880 = vmatprep.subr.mxu0 0.0
      %881 = vmatpush1.msra.mxu0 0.0
      %882 = vmatprep.subr.mxu0 0.0
      %883 = vmatpush1.msra.mxu0 0.0
      %884 = vmatprep.subr.mxu0 0.0
      %885 = vmatpush1.msra.mxu0 0.0
      %886 = vmatprep.subr.mxu0 0.0
      %887 = vmatpush1.msra.mxu0 0.0
      %888 = vmatprep.subr.mxu0 0.0
      %889 = vmatpush1.msra.mxu0 0.0
      %890 = vmatprep.subr.mxu0 0.0
      %891 = vmatpush1.msra.mxu0 0.0
      %892 = vmatprep.subr.mxu0 0.0
      %893 = vmatpush1.msra.mxu0 %v879
      %894 = vmatprep.subr.mxu0 0.0
      %895 = vmatpush1.msra.mxu0 %v878
      %896 = vmatprep.subr.mxu0 0.0
      %897 = vmatpush1.msra.mxu0 %v877
      %898 = vmatprep.subr.mxu0 0.0
      %899 = vmatpush1.msra.mxu0 %v876
      %900 = vmatprep.subr.mxu0 0.0
      %901 = vmatpush1.msra.mxu0 %v875
      %902 = vmatprep.subr.mxu0 0.0
      %903 = vmatpush1.msra.mxu0 %v874
      %904 = vmatprep.subr.mxu0 0.0
      %905 = vmatpush1.msra.mxu0 %v873
      %906 = vmatprep.subr.mxu0 0.0
      %907 = vmatpush1.msra.mxu0 %v872
      %908 = vmatprep.subr.mxu0 0.0
      %909 = vmatpush1.msra.mxu0 %v871
      %910 = vmatprep.subr.mxu0 0.0
      %911 = vmatpush1.msra.mxu0 %v870
      %912 = vmatprep.subr.mxu0 0.0
      %913 = vmatpush2.msra.mxu0 0.0
      %914 = vmatprep.subr.mxu0 0.0
      %915 = vmatpush2.msra.mxu0 0.0
      %916 = vmatprep.subr.mxu0 0.0
      %917 = vmatpush2.msra.mxu0 0.0
      %918 = vmatprep.subr.mxu0 0.0
      %919 = vmatpush2.msra.mxu0 0.0
      %920 = vmatprep.subr.mxu0 0.0
      %921 = vmatpush2.msra.mxu0 0.0
      %922 = vmatprep.subr.mxu0 0.0
      %923 = vmatpush2.msra.mxu0 0.0
      %924 = vmatprep.subr.mxu0 0.0
      %925 = vmatpush2.msra.mxu0 0.0
      %926 = vmatprep.subr.mxu0 0.0
      %927 = vmatpush2.msra.mxu0 0.0
      %928 = vmatprep.subr.mxu0 0.0
      %929 = vmatpush2.msra.mxu0 0.0
      %930 = vmatprep.subr.mxu0 0.0
      %931 = vmatpush2.msra.mxu0 0.0
      %932 = vmatprep.subr.mxu0 0.0
      %933 = vmatpush2.msra.mxu0 0.0
      %934 = vmatprep.subr.mxu0 0.0
      %935 = vmatpush2.msra.mxu0 0.0
      %936 = vmatprep.subr.mxu0 0.0
      %937 = vmatpush2.msra.mxu0 0.0
      %938 = vmatprep.subr.mxu0 0.0
      %939 = vmatpush2.msra.mxu0 0.0
      %940 = vmatprep.subr.mxu0 0.0
      %941 = vmatpush2.msra.mxu0 0.0
      %942 = vmatprep.subr.mxu0 0.0
      %943 = vmatpush2.msra.mxu0 0.0
      %944 = vmatprep.mubr.f32.mxu0 0.0
      %945 = vmatmul.mubr.f32.gmra.mxu0 %v450
      %v946 = vpop.f32.mrf.mxu0
      %v947 = vadd.f32 0.0, %v946
      %v948 = vpop.f32.mrf.mxu0
      %949 = vmatprep.mubr.f32.mxu0 0.0
      %950 = vmatmul.mubr.f32.gmra.mxu0 %v453
      %v951 = vpop.f32.mrf.mxu0
      %v952 = vadd.f32 0.0, %v951
      %v953 = vpop.f32.mrf.mxu0
      %954 = vdwg.mxu0
      %v955 = vld [vmem:[%s3 + $0x1e0] sm:$0xff]
      %v956 = vld [vmem:[%s3 + $0x1e8] sm:$0xff]
      %v957 = vld [vmem:[%s3 + $0x1f0] sm:$0xff]
      %v958 = vld [vmem:[%s3 + $0x1f8] sm:$0xff]
      %v959 = vld [vmem:[%s3 + $0x200] sm:$0xff]
      %v960 = vld [vmem:[%s3 + $0x208] sm:$0xff]
      %v961 = vld [vmem:[%s3 + $0x210] sm:$0xff]
      %v962 = vld [vmem:[%s3 + $0x218] sm:$0xff]
      %v963 = vld [vmem:[%s3 + $0x220] sm:$0xff]
      %v964 = vld [vmem:[%s3 + $0x228] sm:$0xff]
      %965 = vmatprep.subr.mxu0 0.0
      %966 = vmatpush1.msra.mxu0 0.0
      %967 = vmatprep.subr.mxu0 0.0
      %968 = vmatpush1.msra.mxu0 0.0
      %969 = vmatprep.subr.mxu0 0.0
      %970 = vmatpush1.msra.mxu0 0.0
      %971 = vmatprep.subr.mxu0 0.0
      %972 = vmatpush1.msra.mxu0 0.0
      %973 = vmatprep.subr.mxu0 0.0
      %974 = vmatpush1.msra.mxu0 0.0
      %975 = vmatprep.subr.mxu0 0.0
      %976 = vmatpush1.msra.mxu0 0.0
      %977 = vmatprep.subr.mxu0 0.0
      %978 = vmatpush1.msra.mxu0 %v964
      %979 = vmatprep.subr.mxu0 0.0
      %980 = vmatpush1.msra.mxu0 %v963
      %981 = vmatprep.subr.mxu0 0.0
      %982 = vmatpush1.msra.mxu0 %v962
      %983 = vmatprep.subr.mxu0 0.0
      %984 = vmatpush1.msra.mxu0 %v961
      %985 = vmatprep.subr.mxu0 0.0
      %986 = vmatpush1.msra.mxu0 %v960
      %987 = vmatprep.subr.mxu0 0.0
      %988 = vmatpush1.msra.mxu0 %v959
      %989 = vmatprep.subr.mxu0 0.0
      %990 = vmatpush1.msra.mxu0 %v958
      %991 = vmatprep.subr.mxu0 0.0
      %992 = vmatpush1.msra.mxu0 %v957
      %993 = vmatprep.subr.mxu0 0.0
      %994 = vmatpush1.msra.mxu0 %v956
      %995 = vmatprep.subr.mxu0 0.0
      %996 = vmatpush1.msra.mxu0 %v955
      %997 = vmatprep.subr.mxu0 0.0
      %998 = vmatpush2.msra.mxu0 0.0
      %999 = vmatprep.subr.mxu0 0.0
      %1000 = vmatpush2.msra.mxu0 0.0
      %1001 = vmatprep.subr.mxu0 0.0
      %1002 = vmatpush2.msra.mxu0 0.0
      %1003 = vmatprep.subr.mxu0 0.0
      %1004 = vmatpush2.msra.mxu0 0.0
      %1005 = vmatprep.subr.mxu0 0.0
      %1006 = vmatpush2.msra.mxu0 0.0
      %1007 = vmatprep.subr.mxu0 0.0
      %1008 = vmatpush2.msra.mxu0 0.0
      %1009 = vmatprep.subr.mxu0 0.0
      %1010 = vmatpush2.msra.mxu0 0.0
      %1011 = vmatprep.subr.mxu0 0.0
      %1012 = vmatpush2.msra.mxu0 0.0
      %1013 = vmatprep.subr.mxu0 0.0
      %1014 = vmatpush2.msra.mxu0 0.0
      %1015 = vmatprep.subr.mxu0 0.0
      %1016 = vmatpush2.msra.mxu0 0.0
      %1017 = vmatprep.subr.mxu0 0.0
      %1018 = vmatpush2.msra.mxu0 0.0
      %1019 = vmatprep.subr.mxu0 0.0
      %1020 = vmatpush2.msra.mxu0 0.0
      %1021 = vmatprep.subr.mxu0 0.0
      %1022 = vmatpush2.msra.mxu0 0.0
      %1023 = vmatprep.subr.mxu0 0.0
      %1024 = vmatpush2.msra.mxu0 0.0
      %1025 = vmatprep.subr.mxu0 0.0
      %1026 = vmatpush2.msra.mxu0 0.0
      %1027 = vmatprep.subr.mxu0 0.0
      %1028 = vmatpush2.msra.mxu0 0.0
      %1029 = vmatprep.mubr.f32.mxu0 0.0
      %1030 = vmatmul.mubr.f32.gmra.mxu0 %v450
      %v1031 = vpop.f32.mrf.mxu0
      %v1032 = vadd.f32 0.0, %v1031
      %v1033 = vpop.f32.mrf.mxu0
      %1034 = vmatprep.mubr.f32.mxu0 0.0
      %1035 = vmatmul.mubr.f32.gmra.mxu0 %v453
      %v1036 = vpop.f32.mrf.mxu0
      %v1037 = vadd.f32 0.0, %v1036
      %v1038 = vpop.f32.mrf.mxu0
      %1039 = vdwg.mxu0
      %v1040 = vld [vmem:[%s3 + $0x230] sm:$0xff]
      %v1041 = vld [vmem:[%s3 + $0x238] sm:$0xff]
      %v1042 = vld [vmem:[%s3 + $0x240] sm:$0xff]
      %v1043 = vld [vmem:[%s3 + $0x248] sm:$0xff]
      %v1044 = vld [vmem:[%s3 + $0x250] sm:$0xff]
      %v1045 = vld [vmem:[%s3 + $0x258] sm:$0xff]
      %v1046 = vld [vmem:[%s3 + $0x260] sm:$0xff]
      %v1047 = vld [vmem:[%s3 + $0x268] sm:$0xff]
      %v1048 = vld [vmem:[%s3 + $0x270] sm:$0xff]
      %v1049 = vld [vmem:[%s3 + $0x278] sm:$0xff]
      %1050 = vmatprep.subr.mxu0 0.0
      %1051 = vmatpush1.msra.mxu0 0.0
      %1052 = vmatprep.subr.mxu0 0.0
      %1053 = vmatpush1.msra.mxu0 0.0
      %1054 = vmatprep.subr.mxu0 0.0
      %1055 = vmatpush1.msra.mxu0 0.0
      %1056 = vmatprep.subr.mxu0 0.0
      %1057 = vmatpush1.msra.mxu0 0.0
      %1058 = vmatprep.subr.mxu0 0.0
      %1059 = vmatpush1.msra.mxu0 0.0
      %1060 = vmatprep.subr.mxu0 0.0
      %1061 = vmatpush1.msra.mxu0 0.0
      %1062 = vmatprep.subr.mxu0 0.0
      %1063 = vmatpush1.msra.mxu0 %v1049
      %1064 = vmatprep.subr.mxu0 0.0
      %1065 = vmatpush1.msra.mxu0 %v1048
      %1066 = vmatprep.subr.mxu0 0.0
      %1067 = vmatpush1.msra.mxu0 %v1047
      %1068 = vmatprep.subr.mxu0 0.0
      %1069 = vmatpush1.msra.mxu0 %v1046
      %1070 = vmatprep.subr.mxu0 0.0
      %1071 = vmatpush1.msra.mxu0 %v1045
      %1072 = vmatprep.subr.mxu0 0.0
      %1073 = vmatpush1.msra.mxu0 %v1044
      %1074 = vmatprep.subr.mxu0 0.0
      %1075 = vmatpush1.msra.mxu0 %v1043
      %1076 = vmatprep.subr.mxu0 0.0
      %1077 = vmatpush1.msra.mxu0 %v1042
      %1078 = vmatprep.subr.mxu0 0.0
      %1079 = vmatpush1.msra.mxu0 %v1041
      %1080 = vmatprep.subr.mxu0 0.0
      %1081 = vmatpush1.msra.mxu0 %v1040
      %1082 = vmatprep.subr.mxu0 0.0
      %1083 = vmatpush2.msra.mxu0 0.0
      %1084 = vmatprep.subr.mxu0 0.0
      %1085 = vmatpush2.msra.mxu0 0.0
      %1086 = vmatprep.subr.mxu0 0.0
      %1087 = vmatpush2.msra.mxu0 0.0
      %1088 = vmatprep.subr.mxu0 0.0
      %1089 = vmatpush2.msra.mxu0 0.0
      %1090 = vmatprep.subr.mxu0 0.0
      %1091 = vmatpush2.msra.mxu0 0.0
      %1092 = vmatprep.subr.mxu0 0.0
      %1093 = vmatpush2.msra.mxu0 0.0
      %1094 = vmatprep.subr.mxu0 0.0
      %1095 = vmatpush2.msra.mxu0 0.0
      %1096 = vmatprep.subr.mxu0 0.0
      %1097 = vmatpush2.msra.mxu0 0.0
      %1098 = vmatprep.subr.mxu0 0.0
      %1099 = vmatpush2.msra.mxu0 0.0
      %1100 = vmatprep.subr.mxu0 0.0
      %1101 = vmatpush2.msra.mxu0 0.0
      %1102 = vmatprep.subr.mxu0 0.0
      %1103 = vmatpush2.msra.mxu0 0.0
      %1104 = vmatprep.subr.mxu0 0.0
      %1105 = vmatpush2.msra.mxu0 0.0
      %1106 = vmatprep.subr.mxu0 0.0
      %1107 = vmatpush2.msra.mxu0 0.0
      %1108 = vmatprep.subr.mxu0 0.0
      %1109 = vmatpush2.msra.mxu0 0.0
      %1110 = vmatprep.subr.mxu0 0.0
      %1111 = vmatpush2.msra.mxu0 0.0
      %1112 = vmatprep.subr.mxu0 0.0
      %1113 = vmatpush2.msra.mxu0 0.0
      %1114 = vmatprep.mubr.f32.mxu0 0.0
      %1115 = vmatmul.mubr.f32.gmra.mxu0 %v450
      %v1116 = vpop.f32.mrf.mxu0
      %v1117 = vadd.f32 0.0, %v1116
      %v1118 = vpop.f32.mrf.mxu0
      %1119 = vmatprep.mubr.f32.mxu0 0.0
      %1120 = vmatmul.mubr.f32.gmra.mxu0 %v453
      %v1121 = vpop.f32.mrf.mxu0
      %v1122 = vadd.f32 0.0, %v1121
      %v1123 = vpop.f32.mrf.mxu0
      %1124 = vdwg.mxu0
      %v1125 = vld [vmem:[%s3 + $0x280] sm:$0xff]
      %v1126 = vld [vmem:[%s3 + $0x288] sm:$0xff]
      %v1127 = vld [vmem:[%s3 + $0x290] sm:$0xff]
      %v1128 = vld [vmem:[%s3 + $0x298] sm:$0xff]
      %v1129 = vld [vmem:[%s3 + $0x2a0] sm:$0xff]
      %v1130 = vld [vmem:[%s3 + $0x2a8] sm:$0xff]
      %v1131 = vld [vmem:[%s3 + $0x2b0] sm:$0xff]
      %v1132 = vld [vmem:[%s3 + $0x2b8] sm:$0xff]
      %v1133 = vld [vmem:[%s3 + $0x2c0] sm:$0xff]
      %v1134 = vld [vmem:[%s3 + $0x2c8] sm:$0xff]
      %1135 = vmatprep.subr.mxu0 0.0
      %1136 = vmatpush1.msra.mxu0 0.0
      %1137 = vmatprep.subr.mxu0 0.0
      %1138 = vmatpush1.msra.mxu0 0.0
      %1139 = vmatprep.subr.mxu0 0.0
      %1140 = vmatpush1.msra.mxu0 0.0
      %1141 = vmatprep.subr.mxu0 0.0
      %1142 = vmatpush1.msra.mxu0 0.0
      %1143 = vmatprep.subr.mxu0 0.0
      %1144 = vmatpush1.msra.mxu0 0.0
      %1145 = vmatprep.subr.mxu0 0.0
      %1146 = vmatpush1.msra.mxu0 0.0
      %1147 = vmatprep.subr.mxu0 0.0
      %1148 = vmatpush1.msra.mxu0 %v1134
      %1149 = vmatprep.subr.mxu0 0.0
      %1150 = vmatpush1.msra.mxu0 %v1133
      %1151 = vmatprep.subr.mxu0 0.0
      %1152 = vmatpush1.msra.mxu0 %v1132
      %1153 = vmatprep.subr.mxu0 0.0
      %1154 = vmatpush1.msra.mxu0 %v1131
      %1155 = vmatprep.subr.mxu0 0.0
      %1156 = vmatpush1.msra.mxu0 %v1130
      %1157 = vmatprep.subr.mxu0 0.0
      %1158 = vmatpush1.msra.mxu0 %v1129
      %1159 = vmatprep.subr.mxu0 0.0
      %1160 = vmatpush1.msra.mxu0 %v1128
      %1161 = vmatprep.subr.mxu0 0.0
      %1162 = vmatpush1.msra.mxu0 %v1127
      %1163 = vmatprep.subr.mxu0 0.0
      %1164 = vmatpush1.msra.mxu0 %v1126
      %1165 = vmatprep.subr.mxu0 0.0
      %1166 = vmatpush1.msra.mxu0 %v1125
      %1167 = vmatprep.subr.mxu0 0.0
      %1168 = vmatpush2.msra.mxu0 0.0
      %1169 = vmatprep.subr.mxu0 0.0
      %1170 = vmatpush2.msra.mxu0 0.0
      %1171 = vmatprep.subr.mxu0 0.0
      %1172 = vmatpush2.msra.mxu0 0.0
      %1173 = vmatprep.subr.mxu0 0.0
      %1174 = vmatpush2.msra.mxu0 0.0
      %1175 = vmatprep.subr.mxu0 0.0
      %1176 = vmatpush2.msra.mxu0 0.0
      %1177 = vmatprep.subr.mxu0 0.0
      %1178 = vmatpush2.msra.mxu0 0.0
      %1179 = vmatprep.subr.mxu0 0.0
      %1180 = vmatpush2.msra.mxu0 0.0
      %1181 = vmatprep.subr.mxu0 0.0
      %1182 = vmatpush2.msra.mxu0 0.0
      %1183 = vmatprep.subr.mxu0 0.0
      %1184 = vmatpush2.msra.mxu0 0.0
      %1185 = vmatprep.subr.mxu0 0.0
      %1186 = vmatpush2.msra.mxu0 0.0
      %1187 = vmatprep.subr.mxu0 0.0
      %1188 = vmatpush2.msra.mxu0 0.0
      %1189 = vmatprep.subr.mxu0 0.0
      %1190 = vmatpush2.msra.mxu0 0.0
      %1191 = vmatprep.subr.mxu0 0.0
      %1192 = vmatpush2.msra.mxu0 0.0
      %1193 = vmatprep.subr.mxu0 0.0
      %1194 = vmatpush2.msra.mxu0 0.0
      %1195 = vmatprep.subr.mxu0 0.0
      %1196 = vmatpush2.msra.mxu0 0.0
      %1197 = vmatprep.subr.mxu0 0.0
      %1198 = vmatpush2.msra.mxu0 0.0
      %1199 = vmatprep.mubr.f32.mxu0 0.0
      %1200 = vmatmul.mubr.f32.gmra.mxu0 %v450
      %v1201 = vpop.f32.mrf.mxu0
      %v1202 = vadd.f32 0.0, %v1201
      %v1203 = vpop.f32.mrf.mxu0
      %1204 = vmatprep.mubr.f32.mxu0 0.0
      %1205 = vmatmul.mubr.f32.gmra.mxu0 %v453
      %v1206 = vpop.f32.mrf.mxu0
      %v1207 = vadd.f32 0.0, %v1206
      %v1208 = vpop.f32.mrf.mxu0
      %1209 = vdwg.mxu0
      %v1210 = vld [vmem:[%s5] sm:$0xff]
      %v1211 = vld [vmem:[%s5 + $0x8] sm:$0xff]
      %v1212 = vld [vmem:[%s5 + $0x10] sm:$0xff]
      %v1213 = vld [vmem:[%s5 + $0x18] sm:$0xff]
      %v1214 = vld [vmem:[%s4] sm:$0x1]
      %v1216 = vlaneseq
      %v1217 = vshrl.u32 %v1216, 7
      %v1218 = vsub.s32 0, %v1217
      %v1219 = vrot.slane %v1214, %v1218
      %vm1221 = vcmask 130048
      %v1223 = vsel %vm1221, %v1211, 0
      %v1226 = vsel %vm1221, %v1213, 0
      %1228 = vmatprep.subr.mxu0 0.0
      %1229 = vmatpush1.msra.mxu0 %v1122
      %1230 = vmatprep.subr.mxu0 0.0
      %1231 = vmatpush1.msra.mxu0 %v1117
      %1232 = vmatprep.subr.mxu0 0.0
      %1233 = vmatpush1.msra.mxu0 %v1037
      %1234 = vmatprep.subr.mxu0 0.0
      %1235 = vmatpush1.msra.mxu0 %v1032
      %1236 = vmatprep.subr.mxu0 0.0
      %1237 = vmatpush1.msra.mxu0 %v952
      %1238 = vmatprep.subr.mxu0 0.0
      %1239 = vmatpush1.msra.mxu0 %v947
      %1240 = vmatprep.subr.mxu0 0.0
      %1241 = vmatpush1.msra.mxu0 %v867
      %1242 = vmatprep.subr.mxu0 0.0
      %1243 = vmatpush1.msra.mxu0 %v862
      %1244 = vmatprep.subr.mxu0 0.0
      %1245 = vmatpush1.msra.mxu0 %v782
      %1246 = vmatprep.subr.mxu0 0.0
      %1247 = vmatpush1.msra.mxu0 %v777
      %1248 = vmatprep.subr.mxu0 0.0
      %1249 = vmatpush1.msra.mxu0 %v697
      %1250 = vmatprep.subr.mxu0 0.0
      %1251 = vmatpush1.msra.mxu0 %v692
      %1252 = vmatprep.subr.mxu0 0.0
      %1253 = vmatpush1.msra.mxu0 %v612
      %1254 = vmatprep.subr.mxu0 0.0
      %1255 = vmatpush1.msra.mxu0 %v607
      %1256 = vmatprep.subr.mxu0 0.0
      %1257 = vmatpush1.msra.mxu0 %v527
      %1258 = vmatprep.subr.mxu0 0.0
      %1259 = vmatpush1.msra.mxu0 %v522
      %1260 = vmatprep.subr.mxu0 0.0
      %1261 = vmatpush2.msra.mxu0 0.0
      %1262 = vmatprep.subr.mxu0 0.0
      %1263 = vmatpush2.msra.mxu0 0.0
      %1264 = vmatprep.subr.mxu0 0.0
      %1265 = vmatpush2.msra.mxu0 0.0
      %1266 = vmatprep.subr.mxu0 0.0
      %1267 = vmatpush2.msra.mxu0 0.0
      %1268 = vmatprep.subr.mxu0 0.0
      %1269 = vmatpush2.msra.mxu0 0.0
      %1270 = vmatprep.subr.mxu0 0.0
      %1271 = vmatpush2.msra.mxu0 0.0
      %1272 = vmatprep.subr.mxu0 0.0
      %1273 = vmatpush2.msra.mxu0 0.0
      %1274 = vmatprep.subr.mxu0 0.0
      %1275 = vmatpush2.msra.mxu0 0.0
      %1276 = vmatprep.subr.mxu0 0.0
      %1277 = vmatpush2.msra.mxu0 0.0
      %1278 = vmatprep.subr.mxu0 0.0
      %1279 = vmatpush2.msra.mxu0 0.0
      %1280 = vmatprep.subr.mxu0 0.0
      %1281 = vmatpush2.msra.mxu0 0.0
      %1282 = vmatprep.subr.mxu0 0.0
      %1283 = vmatpush2.msra.mxu0 0.0
      %1284 = vmatprep.subr.mxu0 0.0
      %1285 = vmatpush2.msra.mxu0 0.0
      %1286 = vmatprep.subr.mxu0 0.0
      %1287 = vmatpush2.msra.mxu0 0.0
      %1288 = vmatprep.subr.mxu0 0.0
      %1289 = vmatpush2.msra.mxu0 %v1207
      %1290 = vmatprep.subr.mxu0 0.0
      %1291 = vmatpush2.msra.mxu0 %v1202
      %1292 = vmatprep.mubr.f32.mxu0 %v1223
      %1293 = vmatmul.mubr.f32.gmra.mxu0 %v1210
      %v1294 = vpop.f32.mrf.mxu0
      %v1295 = vadd.f32 %v1219, %v1294
      %v1296 = vpop.f32.mrf.mxu0
      %1297 = vmatprep.mubr.f32.mxu0 %v1226
      %1298 = vmatmul.mubr.f32.gmra.mxu0 %v1212
      %v1299 = vpop.f32.mrf.mxu0
      %v1300 = vadd.f32 %v1219, %v1299
      %v1301 = vpop.f32.mrf.mxu0
      %1302 = vdwg.mxu0
      %v1303 = vmax.f32 %v1295, 0.0
      %v1304 = vmax.f32 %v1300, 0.0
      %v1305 = vmul.f32 %v336, %v1303
      %v1306 = vmul.f32 %v337, %v1304
      %v1307 = vld [vmem:[%s6] sm:$0xff]
      %v1308 = vld [vmem:[%s6 + $0x8] sm:$0xff]
      %v1309 = vld [vmem:[%s6 + $0x10] sm:$0xff]
      %v1310 = vld [vmem:[%s6 + $0x18] sm:$0xff]
      %v1311 = vld [vmem:[%s6 + $0x20] sm:$0xff]
      %v1312 = vld [vmem:[%s6 + $0x28] sm:$0xff]
      %v1313 = vld [vmem:[%s6 + $0x30] sm:$0xff]
      %v1314 = vld [vmem:[%s6 + $0x38] sm:$0xff]
      %v1315 = vld [vmem:[%s6 + $0x40] sm:$0xff]
      %v1316 = vld [vmem:[%s6 + $0x48] sm:$0xff]
      %v1317 = vld [vmem:[%s6 + $0x50] sm:$0xff]
      %v1318 = vld [vmem:[%s6 + $0x58] sm:$0xff]
      %v1319 = vld [vmem:[%s6 + $0x60] sm:$0xff]
      %v1320 = vld [vmem:[%s6 + $0x68] sm:$0xff]
      %v1321 = vld [vmem:[%s6 + $0x70] sm:$0xff]
      %v1322 = vld [vmem:[%s6 + $0x78] sm:$0xff]
      %v1323 = vld [vmem:[%s7] sm:$0xff]
      %v1324 = vld [vmem:[%s7 + $0x8] sm:$0xff]
      %v1325 = vld [vmem:[%s7 + $0x10] sm:$0xff]
      %v1326 = vld [vmem:[%s7 + $0x18] sm:$0xff]
      %v1327 = vld [vmem:[%s7 + $0x20] sm:$0xff]
      %v1328 = vld [vmem:[%s7 + $0x28] sm:$0xff]
      %v1329 = vld [vmem:[%s7 + $0x30] sm:$0xff]
      %v1330 = vld [vmem:[%s7 + $0x38] sm:$0xff]
      %v1331 = vld [vmem:[%s7 + $0x40] sm:$0xff]
      %v1332 = vld [vmem:[%s7 + $0x48] sm:$0xff]
      %v1333 = vld [vmem:[%s7 + $0x50] sm:$0xff]
      %v1334 = vld [vmem:[%s7 + $0x58] sm:$0xff]
      %v1335 = vld [vmem:[%s7 + $0x60] sm:$0xff]
      %v1336 = vld [vmem:[%s7 + $0x68] sm:$0xff]
      %v1337 = vld [vmem:[%s7 + $0x70] sm:$0xff]
      %v1338 = vld [vmem:[%s7 + $0x78] sm:$0xff]
      %1339 = vmatprep.subr.mxu0 0.0
      %1340 = vmatpush1.msra.mxu0 %v1338
      %1341 = vmatprep.subr.mxu0 0.0
      %1342 = vmatpush1.msra.mxu0 %v1337
      %1343 = vmatprep.subr.mxu0 0.0
      %1344 = vmatpush1.msra.mxu0 %v1336
      %1345 = vmatprep.subr.mxu0 0.0
      %1346 = vmatpush1.msra.mxu0 %v1335
      %1347 = vmatprep.subr.mxu0 0.0
      %1348 = vmatpush1.msra.mxu0 %v1334
      %1349 = vmatprep.subr.mxu0 0.0
      %1350 = vmatpush1.msra.mxu0 %v1333
      %1351 = vmatprep.subr.mxu0 0.0
      %1352 = vmatpush1.msra.mxu0 %v1332
      %1353 = vmatprep.subr.mxu0 0.0
      %1354 = vmatpush1.msra.mxu0 %v1331
      %1355 = vmatprep.subr.mxu0 0.0
      %1356 = vmatpush1.msra.mxu0 %v1330
      %1357 = vmatprep.subr.mxu0 0.0
      %1358 = vmatpush1.msra.mxu0 %v1329
      %1359 = vmatprep.subr.mxu0 0.0
      %1360 = vmatpush1.msra.mxu0 %v1328
      %1361 = vmatprep.subr.mxu0 0.0
      %1362 = vmatpush1.msra.mxu0 %v1327
      %1363 = vmatprep.subr.mxu0 0.0
      %1364 = vmatpush1.msra.mxu0 %v1326
      %1365 = vmatprep.subr.mxu0 0.0
      %1366 = vmatpush1.msra.mxu0 %v1325
      %1367 = vmatprep.subr.mxu0 0.0
      %1368 = vmatpush1.msra.mxu0 %v1324
      %1369 = vmatprep.subr.mxu0 0.0
      %1370 = vmatpush1.msra.mxu0 %v1323
      %1371 = vmatprep.subr.mxu0 0.0
      %1372 = vmatpush2.msra.mxu0 0.0
      %1373 = vmatprep.subr.mxu0 0.0
      %1374 = vmatpush2.msra.mxu0 0.0
      %1375 = vmatprep.subr.mxu0 0.0
      %1376 = vmatpush2.msra.mxu0 0.0
      %1377 = vmatprep.subr.mxu0 0.0
      %1378 = vmatpush2.msra.mxu0 0.0
      %1379 = vmatprep.subr.mxu0 0.0
      %1380 = vmatpush2.msra.mxu0 0.0
      %1381 = vmatprep.subr.mxu0 0.0
      %1382 = vmatpush2.msra.mxu0 0.0
      %1383 = vmatprep.subr.mxu0 0.0
      %1384 = vmatpush2.msra.mxu0 0.0
      %1385 = vmatprep.subr.mxu0 0.0
      %1386 = vmatpush2.msra.mxu0 0.0
      %1387 = vmatprep.subr.mxu0 0.0
      %1388 = vmatpush2.msra.mxu0 0.0
      %1389 = vmatprep.subr.mxu0 0.0
      %1390 = vmatpush2.msra.mxu0 0.0
      %1391 = vmatprep.subr.mxu0 0.0
      %1392 = vmatpush2.msra.mxu0 0.0
      %1393 = vmatprep.subr.mxu0 0.0
      %1394 = vmatpush2.msra.mxu0 0.0
      %1395 = vmatprep.subr.mxu0 0.0
      %1396 = vmatpush2.msra.mxu0 0.0
      %1397 = vmatprep.subr.mxu0 0.0
      %1398 = vmatpush2.msra.mxu0 0.0
      %1399 = vmatprep.subr.mxu0 0.0
      %1400 = vmatpush2.msra.mxu0 0.0
      %1401 = vmatprep.subr.mxu0 0.0
      %1402 = vmatpush2.msra.mxu0 0.0
      %1403 = vmatprep.mubr.f32.mxu0 0.0
      %1404 = vmatmul.mubr.f32.gmra.mxu0 %v1305
      %v1405 = vpop.f32.mrf.mxu0
      %v1406 = vadd.f32 0.0, %v1405
      %v1407 = vpop.f32.mrf.mxu0
      %1408 = vmatprep.mubr.f32.mxu0 0.0
      %1409 = vmatmul.mubr.f32.gmra.mxu0 %v1306
      %v1410 = vpop.f32.mrf.mxu0
      %v1411 = vadd.f32 0.0, %v1410
      %v1412 = vpop.f32.mrf.mxu0
      %1413 = vdwg.mxu0
      %1414 = vmatprep.subr.mxu0 0.0
      %1415 = vmatpush1.msra.mxu0 %v1322
      %1416 = vmatprep.subr.mxu0 0.0
      %1417 = vmatpush1.msra.mxu0 %v1321
      %1418 = vmatprep.subr.mxu0 0.0
      %1419 = vmatpush1.msra.mxu0 %v1320
      %1420 = vmatprep.subr.mxu0 0.0
      %1421 = vmatpush1.msra.mxu0 %v1319
      %1422 = vmatprep.subr.mxu0 0.0
      %1423 = vmatpush1.msra.mxu0 %v1318
      %1424 = vmatprep.subr.mxu0 0.0
      %1425 = vmatpush1.msra.mxu0 %v1317
      %1426 = vmatprep.subr.mxu0 0.0
      %1427 = vmatpush1.msra.mxu0 %v1316
      %1428 = vmatprep.subr.mxu0 0.0
      %1429 = vmatpush1.msra.mxu0 %v1315
      %1430 = vmatprep.subr.mxu0 0.0
      %1431 = vmatpush1.msra.mxu0 %v1314
      %1432 = vmatprep.subr.mxu0 0.0
      %1433 = vmatpush1.msra.mxu0 %v1313
      %1434 = vmatprep.subr.mxu0 0.0
      %1435 = vmatpush1.msra.mxu0 %v1312
      %1436 = vmatprep.subr.mxu0 0.0
      %1437 = vmatpush1.msra.mxu0 %v1311
      %1438 = vmatprep.subr.mxu0 0.0
      %1439 = vmatpush1.msra.mxu0 %v1310
      %1440 = vmatprep.subr.mxu0 0.0
      %1441 = vmatpush1.msra.mxu0 %v1309
      %1442 = vmatprep.subr.mxu0 0.0
      %1443 = vmatpush1.msra.mxu0 %v1308
      %1444 = vmatprep.subr.mxu0 0.0
      %1445 = vmatpush1.msra.mxu0 %v1307
      %1446 = vmatprep.subr.mxu0 0.0
      %1447 = vmatpush2.msra.mxu0 0.0
      %1448 = vmatprep.subr.mxu0 0.0
      %1449 = vmatpush2.msra.mxu0 0.0
      %1450 = vmatprep.subr.mxu0 0.0
      %1451 = vmatpush2.msra.mxu0 0.0
      %1452 = vmatprep.subr.mxu0 0.0
      %1453 = vmatpush2.msra.mxu0 0.0
      %1454 = vmatprep.subr.mxu0 0.0
      %1455 = vmatpush2.msra.mxu0 0.0
      %1456 = vmatprep.subr.mxu0 0.0
      %1457 = vmatpush2.msra.mxu0 0.0
      %1458 = vmatprep.subr.mxu0 0.0
      %1459 = vmatpush2.msra.mxu0 0.0
      %1460 = vmatprep.subr.mxu0 0.0
      %1461 = vmatpush2.msra.mxu0 0.0
      %1462 = vmatprep.subr.mxu0 0.0
      %1463 = vmatpush2.msra.mxu0 0.0
      %1464 = vmatprep.subr.mxu0 0.0
      %1465 = vmatpush2.msra.mxu0 0.0
      %1466 = vmatprep.subr.mxu0 0.0
      %1467 = vmatpush2.msra.mxu0 0.0
      %1468 = vmatprep.subr.mxu0 0.0
      %1469 = vmatpush2.msra.mxu0 0.0
      %1470 = vmatprep.subr.mxu0 0.0
      %1471 = vmatpush2.msra.mxu0 0.0
      %1472 = vmatprep.subr.mxu0 0.0
      %1473 = vmatpush2.msra.mxu0 0.0
      %1474 = vmatprep.subr.mxu0 0.0
      %1475 = vmatpush2.msra.mxu0 0.0
      %1476 = vmatprep.subr.mxu0 0.0
      %1477 = vmatpush2.msra.mxu0 0.0
      %1478 = vmatprep.mubr.f32.mxu0 0.0
      %1479 = vmatmul.mubr.f32.gmra.mxu0 %v336
      %v1480 = vpop.f32.mrf.mxu0
      %v1481 = vadd.f32 %v1406, %v1480
      %v1482 = vpop.f32.mrf.mxu0
      %1483 = vmatprep.mubr.f32.mxu0 0.0
      %1484 = vmatmul.mubr.f32.gmra.mxu0 %v337
      %v1485 = vpop.f32.mrf.mxu0
      %v1486 = vadd.f32 %v1411, %v1485
      %v1487 = vpop.f32.mrf.mxu0
      %1488 = vdwg.mxu0
      %v1489 = vld [vmem:[%s8] sm:$0x1]
      %v1491 = vlaneseq
      %v1492 = vshrl.u32 %v1491, 7
      %v1493 = vsub.s32 0, %v1492
      %v1494 = vrot.slane %v1489, %v1493
      %v1496 = vadd.f32 %v1481, %v1494
      %v1497 = vadd.f32 %v1486, %v1494
      %v1498 = vmax.f32 %v1496, 0.0
      %v1499 = vmax.f32 %v1497, 0.0
      %1500 = vst [vmem:[%s334] sm:$0xff] %v1498
      %1501 = vst [vmem:[%s334 + $0x8] sm:$0xff] %v1499
      %s1502 = smul.u32 2, %s20
      %p1503 = scmp.lt.s32.totalorder %s1502, 3
      %s1504 = scalar_select %p1503, %s1502, 3
      %s1505 = smul.addr %s1504, 8
      %s1506 = scalar_lea.vmem %s9, %s1505
      // Predicated region
      $region57: #{ftb_forward.1} parent=55 // pred_check
        %p1507 = pneg %p232
      $region58: #{ftb_forward.1} parent=55 // pred_check_branch
        %1509 = sbr.rel (%p1507) target = $region60
      $region59: #{ftb_forward.1} parent=55 // pred_region
        %s1510 = smul.u32 2, %s20
      $region60: #{ftb_forward.1} parent=55 // pred_fallthru
        _
    $region56: #{ftb_forward.1} parent=5 // pred_fallthru
      _
    %p1511 = scmp.le.s32.totalorder 2, %s15
    // Predicated region
    $region61: #{ftb_forward.1} parent=5 // pred_check
      %p1512 = pneg %p1511
    $region62: #{ftb_forward.1} parent=5 // pred_check_branch
      %1514 = sbr.rel (%p1512) target = $region64
    $region63: #{ftb_forward.1} parent=5 // pred_region
      %s1515 = ssub.s32 %s15, 2
      // Predicated region
      $region65: #{ftb_forward.1} parent=63 // pred_check
        %p1516 = pneg %p238
      $region66: #{ftb_forward.1} parent=63 // pred_check_branch
        %1518 = sbr.rel (%p1516) target = $region68
      $region67: #{ftb_forward.1} parent=63 // pred_region
        %s1519 = smul.u32 2, %s21
        %p1520 = scmp.lt.s32.totalorder %s1519, 3
        %s1521 = scalar_select %p1520, %s1519, 3
        %s1522 = smul.addr %s1521, 8
        %s1523 = scalar_lea.vmem %s9, %s1522
      $region68: #{ftb_forward.1} parent=63 // pred_fallthru
        _
    $region64: #{ftb_forward.1} parent=5 // pred_fallthru
      _
  $region6: #{ftb_forward.1} parent=0 // loop_footer
    %s19 = sadd.s32 1, %s15
  $region7: #{ftb_forward.1} parent=0 // loop_footer_branch
    %14 = sbr.rel target = $region3
  $region8: #{ftb_forward.1} parent=0 // loop_exit
    _

</llo_original>
